<compile_context>
chip_gen: v6e
topology: v6e:2x2x1
jax: 0.10.0
libtpu: 0.0.40
codegen_flags: <defaults>
</compile_context>

<pallas_src>
import functools

import jax
import jax.numpy as jnp
import numpy as np
from jax.experimental import pallas as pl
from jax.experimental.pallas import tpu as pltpu


def _norm_softplus_kernel(segT_ref, scatter_ref, bias_ref, scal_ref, x_ref, o_ref,
                          *, eps, use_scalar_act):
    """Processes one (1, C, Ts) tile.

    segT_ref   : (NCAP, C) f32 — row r is the indicator of channels belonging
                 to non-scalar capsule r (padded rows are all-zero).
    scatter_ref: (C, NCAP) f32 — transpose-style broadcast-back map.
    bias_ref   : (NCAP, 1) f32 — per-non-scalar-capsule softplus bias.
    scal_ref   : (C, 1)    f32 — per-channel is-scalar mask (1.0 / 0.0).
    x_ref      : (1, C, Ts) input tile, o_ref: (1, C, Ts) output tile.
    """
    x = x_ref[0].astype(jnp.float32)                 # (C, Ts), lane-dense
    xsq = x * x

    # Per-capsule sum of squares on the otherwise idle MXU; HIGHEST precision
    # keeps the norm f32-exact (free in wall-clock since the MXU is idle).
    sumsq = jnp.dot(segT_ref[...], xsq,
                    precision=jax.lax.Precision.HIGHEST,
                    preferred_element_type=jnp.float32)          # (NCAP, Ts)

    # Fused rsqrt instead of sqrt + reciprocal; eps^2 inside keeps it finite
    # at sumsq == 0 and reproduces norm == eps there.
    r = jax.lax.rsqrt(sumsq + eps * eps)                         # (NCAP, Ts)
    norm = sumsq * r + eps                                       # ~ sqrt(sumsq)+eps
    z = norm - bias_ref[...]
    # torch.nn.Softplus(beta=1, threshold=20): z > 20 -> z, else log1p(exp(z))
    factor = jnp.where(z > 20.0, z, jnp.log1p(jnp.exp(jnp.minimum(z, 20.0))))
    scale_cap = factor * r                                       # (NCAP, Ts)

    # Broadcast per-capsule scale back to channels with a second MXU matmul
    # (scalar-capsule channels get 0 here; the select below overrides them).
    scale = jnp.dot(scatter_ref[...], scale_cap,
                    precision=jax.lax.Precision.HIGHEST,
                    preferred_element_type=jnp.float32)          # (C, Ts)

    scalar_out = jnp.maximum(x, 0.0) if use_scalar_act else x
    out = jnp.where(scal_ref[...] != 0.0, scalar_out, scale * x)
    o_ref[0] = out.astype(o_ref.dtype)                           # one lane-dense store


def _choose_lane_tile(s_pad, c_pad, *, byte_budget, min_steps=1):
    """Largest Ts (multiple of 128 dividing s_pad) whose double-buffered
    f32 in+out working set (4 * c_pad * Ts * 4 B) fits `byte_budget`, with at
    least `min_steps` lane-grid iterations when achievable."""
    n = s_pad // 128
    divisors = [d for d in range(1, n + 1) if n % d == 0]
    max_d_budget = max(1, byte_budget // (4 * c_pad * 4 * 128))
    for want_steps in (min_steps, 1):          # relax min_steps if impossible
        cands = [d for d in divisors if d <= max_d_budget and n // d >= want_steps]
        if cands:
            return 128 * max(cands)
    return 128


def norm_softplus(x, bias, dimensionalities, *, eps=1e-6, use_scalar_act=True,
                  vmem_byte_budget=8 << 20):
    """x: [B, C, X, Y, Z] float32.  bias: [nbias] (one per non-scalar capsule)."""
    B, C, X, Y, Z = x.shape
    dims = tuple(int(d) for d in dimensionalities)
    assert sum(dims) == C
    S = X * Y * Z
    x3 = x.reshape(B, C, S)

    # Pad the lane (spatial) axis to a multiple of 128 -> lane-dense stores.
    S_pad = ((S + 127) // 128) * 128
    if S_pad != S:
        x3 = jnp.pad(x3, ((0, 0), (0, 0), (0, S_pad - S)))

    # --- static per-capsule / per-channel metadata (tiny, built on host) -----
    ncap_ns = sum(1 for d in dims if d != 1)          # number of non-scalar capsules
    NCAP = max(8, ((max(ncap_ns, 1) + 7) // 8) * 8)   # pad rows to sublane multiple
    segT = np.zeros((NCAP, C), np.float32)
    scatter = np.zeros((C, NCAP), np.float32)
    is_scalar = np.zeros((C, 1), np.float32)
    row, off = 0, 0
    for d in dims:
        if d == 1:
            is_scalar[off, 0] = 1.0
        else:
            segT[row, off:off + d] = 1.0
            scatter[off:off + d, row] = 1.0
            row += 1
        off += d

    if bias is None:
        bias = jnp.zeros((0,), jnp.float32)
    bias = jnp.asarray(bias, jnp.float32).reshape(-1)
    assert bias.shape[0] == ncap_ns
    bias_cap = jnp.zeros((NCAP,), jnp.float32).at[:ncap_ns].set(bias).reshape(NCAP, 1)

    # --- tiling ---------------------------------------------------------------
    C_pad = ((C + 7) // 8) * 8                        # VMEM sublane padding of C
    Ts = _choose_lane_tile(S_pad, C_pad, byte_budget=vmem_byte_budget,
                           min_steps=2 if B == 1 else 1)   # keep 2 v7x TCs busy
    grid = (B, S_pad // Ts)

    kernel = functools.partial(_norm_softplus_kernel, eps=float(eps),
                               use_scalar_act=use_scalar_act)

    out = pl.pallas_call(
        kernel,
        out_shape=jax.ShapeDtypeStruct((B, C, S_pad), x.dtype),
        grid=grid,
        in_specs=[
            pl.BlockSpec((NCAP, C), lambda b, s: (0, 0)),      # capsule reduce map
            pl.BlockSpec((C, NCAP), lambda b, s: (0, 0)),      # broadcast-back map
            pl.BlockSpec((NCAP, 1), lambda b, s: (0, 0)),      # per-capsule bias
            pl.BlockSpec((C, 1), lambda b, s: (0, 0)),         # is-scalar mask
            pl.BlockSpec((1, C, Ts), lambda b, s: (b, 0, s)),  # x tile
        ],
        out_specs=pl.BlockSpec((1, C, Ts), lambda b, s: (b, 0, s)),
        compiler_params=pltpu.CompilerParams(
            dimension_semantics=("parallel", "parallel"),
        ),
    )(jnp.asarray(segT), jnp.asarray(scatter), bias_cap, jnp.asarray(is_scalar), x3)

    if S_pad != S:
        out = out[:, :, :S]
    return out.reshape(B, C, X, Y, Z)


def norm_softplus_ref(x, bias, dimensionalities, *, eps=1e-6, use_scalar_act=True):
    """Pure-JAX reference mirroring the PyTorch forward (exact f32)."""
    outs = []
    off = 0
    ib = 0
    for dim in dimensionalities:
        cap = x[:, off:off + dim]
        if dim == 1:
            outs.append(jnp.maximum(cap, 0.0) if use_scalar_act else cap)
        else:
            norm = jnp.sqrt(jnp.sum(cap * cap, axis=1, keepdims=True)) + eps
            z = norm - bias[ib]
            factor = jnp.where(z > 20.0, z, jnp.log1p(jnp.exp(jnp.minimum(z, 20.0))))
            outs.append(factor * (cap / norm))
            ib += 1
        off += dim
    return jnp.concatenate(outs, axis=1)


if __name__ == "__main__":
    # Capsule dimensionalities: two scalar capsules + capsules of dims 3, 3, 5.
    dimensionalities = (1, 1, 3, 3, 5)
    B = 2
    C = sum(dimensionalities)          # 13
    X = Y = Z = 8                      # spatial -> S = 512 lanes

    key = jax.random.PRNGKey(0)
    kx, kb = jax.random.split(key)
    x = jax.random.normal(kx, (B, C, X, Y, Z), dtype=jnp.float32)

    nbias = sum(1 for d in dimensionalities if d != 1)   # 3
    bias = jax.random.uniform(kb, (nbias,), minval=0.5, maxval=2.0,
                              dtype=jnp.float32)

    out = jax.block_until_ready(norm_softplus(x, bias, dimensionalities))
    ref = norm_softplus_ref(x, bias, dimensionalities)

    assert out.shape == x.shape
    # Matmuls run at HIGHEST precision (f32-exact sumsq); remaining error is
    # the EUP rsqrt and the eps-placement difference (both << 5e-3).
    max_err = float(jnp.max(jnp.abs(out - ref)))
    assert jnp.allclose(out, ref, atol=5e-3, rtol=5e-3), (
        f"mismatch vs reference (max abs err {max_err})")

    print("KERNEL_OK")
</pallas_src>

<mosaic_0001>
module attributes {stable_mosaic.version = 11 : i64} {
  func.func @_norm_softplus_kernel(%arg0: i32, %arg1: i32, %arg2: memref<8x13xf32, #tpu.memory_space<vmem>>, %arg3: memref<13x8xf32, #tpu.memory_space<vmem>>, %arg4: memref<8x1xf32, #tpu.memory_space<vmem>>, %arg5: memref<13x1xf32, #tpu.memory_space<vmem>>, %arg6: memref<1x13x512xf32, #tpu.memory_space<vmem>>, %arg7: memref<1x13x512xf32, #tpu.memory_space<vmem>>) attributes {dimension_semantics = [#tpu.dimension_semantics<parallel>, #tpu.dimension_semantics<parallel>], iteration_bounds = array<i64: 2, 1>, scalar_prefetch = 0 : i64, scratch_operands = 0 : i64, tpu.core_type = #tpu.core_type<tc>, window_params = [{pipeline_mode = #tpu.pipeline_mode<synchronous>, transform_indices = @transform_0, window_bounds = array<i64: 8, 13>}, {pipeline_mode = #tpu.pipeline_mode<synchronous>, transform_indices = @transform_1, window_bounds = array<i64: 13, 8>}, {pipeline_mode = #tpu.pipeline_mode<synchronous>, transform_indices = @transform_2, window_bounds = array<i64: 8, 1>}, {pipeline_mode = #tpu.pipeline_mode<synchronous>, transform_indices = @transform_3, window_bounds = array<i64: 13, 1>}, {transform_indices = @transform_4, window_bounds = array<i64: 1, 13, 512>}, {transform_indices = @transform_5, window_bounds = array<i64: 1, 13, 512>}]} {
    %c0 = arith.constant 0 : index
    %c0_0 = arith.constant 0 : index
    %c0_1 = arith.constant 0 : index
    %0 = vector.load %arg6[%c0, %c0_0, %c0_1] : memref<1x13x512xf32, #tpu.memory_space<vmem>>, vector<1x13x512xf32>
    %1 = vector.shape_cast %0 : vector<1x13x512xf32> to vector<13x512xf32>
    %2 = arith.mulf %1, %1 : vector<13x512xf32>
    %c0_2 = arith.constant 0 : index
    %c0_3 = arith.constant 0 : index
    %3 = vector.load %arg2[%c0_2, %c0_3] : memref<8x13xf32, #tpu.memory_space<vmem>>, vector<8x13xf32>
    %cst = arith.constant dense<0.000000e+00> : vector<8x512xf32>
    %4 = tpu.matmul %3, %2, %cst {dimension_numbers = #tpu.dot_dimension_numbers<[1], [0], [0], [1], [0, 0, 1, 1], [], []>, precision = #tpu.contract_precision<fp32>} : vector<8x13xf32>, vector<13x512xf32>, vector<8x512xf32> -> vector<8x512xf32>
    %cst_4 = arith.constant 9.99999996E-13 : f32
    %5 = vector.broadcast %cst_4 : f32 to vector<8x512xf32>
    %6 = arith.addf %4, %5 : vector<8x512xf32>
    %7 = math.rsqrt %6 : vector<8x512xf32>
    %8 = arith.mulf %4, %7 : vector<8x512xf32>
    %cst_5 = arith.constant 9.99999997E-7 : f32
    %9 = vector.broadcast %cst_5 : f32 to vector<8x512xf32>
    %10 = arith.addf %8, %9 : vector<8x512xf32>
    %c0_6 = arith.constant 0 : index
    %c0_7 = arith.constant 0 : index
    %11 = vector.load %arg4[%c0_6, %c0_7] : memref<8x1xf32, #tpu.memory_space<vmem>>, vector<8x1xf32>
    %12 = vector.broadcast %11 : vector<8x1xf32> to vector<8x512xf32>
    %13 = arith.subf %10, %12 : vector<8x512xf32>
    %cst_8 = arith.constant 2.000000e+01 : f32
    %14 = vector.broadcast %cst_8 : f32 to vector<8x512xf32>
    %15 = arith.cmpf ogt, %13, %14 : vector<8x512xf32>
    %cst_9 = arith.constant 2.000000e+01 : f32
    %16 = vector.broadcast %cst_9 : f32 to vector<8x512xf32>
    %17 = arith.minimumf %13, %16 : vector<8x512xf32>
    %18 = math.exp %17 : vector<8x512xf32>
    %19 = math.log1p %18 : vector<8x512xf32>
    %20 = arith.select %15, %13, %19 : vector<8x512xi1>, vector<8x512xf32>
    %21 = arith.mulf %20, %7 : vector<8x512xf32>
    %c0_10 = arith.constant 0 : index
    %c0_11 = arith.constant 0 : index
    %22 = vector.load %arg3[%c0_10, %c0_11] : memref<13x8xf32, #tpu.memory_space<vmem>>, vector<13x8xf32>
    %cst_12 = arith.constant dense<0.000000e+00> : vector<13x512xf32>
    %23 = tpu.matmul %22, %21, %cst_12 {dimension_numbers = #tpu.dot_dimension_numbers<[1], [0], [0], [1], [0, 0, 1, 1], [], []>, precision = #tpu.contract_precision<fp32>} : vector<13x8xf32>, vector<8x512xf32>, vector<13x512xf32> -> vector<13x512xf32>
    %cst_13 = arith.constant 0.000000e+00 : f32
    %24 = vector.broadcast %cst_13 : f32 to vector<13x512xf32>
    %25 = arith.maximumf %1, %24 : vector<13x512xf32>
    %c0_14 = arith.constant 0 : index
    %c0_15 = arith.constant 0 : index
    %26 = vector.load %arg5[%c0_14, %c0_15] : memref<13x1xf32, #tpu.memory_space<vmem>>, vector<13x1xf32>
    %cst_16 = arith.constant 0.000000e+00 : f32
    %27 = vector.broadcast %cst_16 : f32 to vector<13x1xf32>
    %28 = arith.cmpf one, %26, %27 : vector<13x1xf32>
    %29 = arith.mulf %23, %1 : vector<13x512xf32>
    %30 = vector.shape_cast %28 : vector<13x1xi1> to vector<13x1xi1>
    %31 = vector.broadcast %30 : vector<13x1xi1> to vector<13x512xi1>
    %32 = arith.select %31, %25, %29 : vector<13x512xi1>, vector<13x512xf32>
    %c0_17 = arith.constant 0 : index
    %c0_18 = arith.constant 0 : index
    %c0_19 = arith.constant 0 : index
    %33 = vector.load %arg7[%c0_17, %c0_18, %c0_19] : memref<1x13x512xf32, #tpu.memory_space<vmem>>, vector<1x13x512xf32>
    %34 = vector.shape_cast %33 : vector<1x13x512xf32> to vector<13x512xf32>
    %35 = vector.shape_cast %32 : vector<13x512xf32> to vector<1x13x512xf32>
    tpu.vector_store %arg7[%c0_17, %c0_18, %c0_19], %35 {strides = array<i32>} : memref<1x13x512xf32, #tpu.memory_space<vmem>>, vector<1x13x512xf32>,
    return
  }
  func.func @transform_0(%arg0: i32, %arg1: i32) -> (i32, i32) {
    %c0_i32 = arith.constant 0 : i32
    %c0_i32_0 = arith.constant 0 : i32
    %c0_i32_1 = arith.constant 0 : i32
    return %c0_i32, %c0_i32_0 : i32, i32
  }
  func.func @transform_1(%arg0: i32, %arg1: i32) -> (i32, i32) {
    %c0_i32 = arith.constant 0 : i32
    %c0_i32_0 = arith.constant 0 : i32
    %c0_i32_1 = arith.constant 0 : i32
    return %c0_i32, %c0_i32_0 : i32, i32
  }
  func.func @transform_2(%arg0: i32, %arg1: i32) -> (i32, i32) {
    %c0_i32 = arith.constant 0 : i32
    %c0_i32_0 = arith.constant 0 : i32
    %c0_i32_1 = arith.constant 0 : i32
    return %c0_i32, %c0_i32_0 : i32, i32
  }
  func.func @transform_3(%arg0: i32, %arg1: i32) -> (i32, i32) {
    %c0_i32 = arith.constant 0 : i32
    %c0_i32_0 = arith.constant 0 : i32
    %c0_i32_1 = arith.constant 0 : i32
    return %c0_i32, %c0_i32_0 : i32, i32
  }
  func.func @transform_4(%arg0: i32, %arg1: i32) -> (i32, i32, i32) {
    %c0_i32 = arith.constant 0 : i32
    %c0_i32_0 = arith.constant 0 : i32
    return %arg0, %c0_i32, %arg1 : i32, i32, i32
  }
  func.func @transform_5(%arg0: i32, %arg1: i32) -> (i32, i32, i32) {
    %c0_i32 = arith.constant 0 : i32
    %c0_i32_0 = arith.constant 0 : i32
    return %arg0, %c0_i32, %arg1 : i32, i32, i32
  }
}

</mosaic_0001>

<llo_original>
// kernel: tpu_custom_call.1
$region0: #{tpu_custom_call.1}
  #allocation0 [shape = 'u32[]', space=smem, size = 0x4, offset = 0x4, fixed_abs, tag = 'smem constant byte address 0x4 - core index']
  #allocation1 [shape = 'u32[144,128]{1,0:T(1,128)}', space=vmem, size = 0x12000, scoped, tag = 'internal scratch']
  %s0 = inlined_call_operand.vmem [shape: f32[8,13], index: 0, kind: input, shape index: {}]
  %s1 = inlined_call_operand.vmem [shape: f32[13,8], index: 1, kind: input, shape index: {}]
  %s2 = inlined_call_operand.vmem [shape: f32[8,1], index: 2, kind: input, shape index: {}]
  %s3 = inlined_call_operand.vmem [shape: f32[13,1], index: 3, kind: input, shape index: {}]
  %s4 = inlined_call_operand.vmem [shape: f32[2,13,512], index: 4, kind: input, shape index: {}]
  %s5 = inlined_call_operand.vmem [shape: f32[2,13,512], index: 5, kind: output, shape index: {}]
  %s6 = sld [smem:[#allocation0]]
  $region53: #{tpu_custom_call.1} parent=0
    _
  %s8 = ssub.s32 1, %s6
  %s9 = scalar_select 0, %s8, %s6
  loop: start=0, step=1, limit=4
  $region2: #{tpu_custom_call.1} parent=0 // loop_pre_header
    _
  $region3: #{tpu_custom_call.1} parent=0 // loop_header
    %s11 = sphi 0, %s15
    %p12 = scmp.ge.s32.totalorder %s11, 4
    %s18 = sphi 0, %s30
    %s19 = sphi 0, %s26
    %s20 = sphi 0, %s18
    %s21 = sphi 0, %s19
    %s22 = sphi 0, %s20
    %s23 = sphi 0, %s21
    %s31 = sphi 0, %s31
    %s33 = sphi 0, %s31
    %s34 = sphi 0, %s33
    %s48 = sphi 0, %s34
    %s52 = sphi 0, %s52
    %s54 = sphi 0, %s52
    %s55 = sphi 0, %s54
    %s69 = sphi 0, %s55
    %s73 = sphi 0, %s73
    %s75 = sphi 0, %s73
    %s76 = sphi 0, %s75
    %s90 = sphi 0, %s76
    %s94 = sphi 0, %s94
    %s96 = sphi 0, %s94
    %s97 = sphi 0, %s96
    %s111 = sphi 0, %s97
    %s119 = sphi 0, %s121
    %s122 = sphi 0, %s119
    %s123 = sphi 0, %s122
    %s139 = sphi 0, %s123
    %s147 = sphi 0, %s149
    %s150 = sphi 0, %s147
    %s151 = sphi 0, %s150
    %s167 = sphi 0, %s151
  $region4: #{tpu_custom_call.1} parent=0 // loop_header_branch
    %14 = sbr.rel (%p12) target = $region8
  $region5: #{tpu_custom_call.1} parent=0 // loop_body
    %s16 = ssub.s32 %s11, 1
    %s17 = ssub.s32 %s11, 2
    %s24 = sadd.s32 1, %s19
    %p25 = scmp.ge.s32.totalorder %s24, 1
    %s26 = scalar_select %p25, 0, %s24
    %s27 = sadd.s32 1, %s18
    %s28 = scalar_select %p25, %s27, %s18
    %p29 = scmp.ge.s32.totalorder %s28, 2
    %s30 = scalar_select %p29, 0, %s28
    %s32 = sadd.s32 %s31, 1
    %p35 = scmp.eq.s32.totalorder %s11, 1
    %p36 = scmp.ne.s32.totalorder %s31, %s33
    %p37 = scmp.eq.s32.totalorder %s11, 0
    %p38 = por %p36, %p37
    %p39 = scmp.ne.s32.totalorder %s31, %s33
    %p40 = scmp.eq.s32.totalorder %s16, 1
    %p41 = por %p39, %p40
    %p42 = scmp.ne.s32.totalorder %s33, %s34
    %p43 = scmp.eq.s32.totalorder %s16, 0
    %p44 = por %p42, %p43
    %p45 = scmp.ne.s32.totalorder %s33, %s34
    %p46 = scmp.eq.s32.totalorder %s17, 1
    %p47 = por %p45, %p46
    %p49 = scmp.ne.s32.totalorder %s34, %s48
    %p50 = scmp.eq.s32.totalorder %s17, 0
    %p51 = por %p49, %p50
    %s53 = sadd.s32 %s52, 1
    %p56 = scmp.eq.s32.totalorder %s11, 1
    %p57 = scmp.ne.s32.totalorder %s52, %s54
    %p58 = scmp.eq.s32.totalorder %s11, 0
    %p59 = por %p57, %p58
    %p60 = scmp.ne.s32.totalorder %s52, %s54
    %p61 = scmp.eq.s32.totalorder %s16, 1
    %p62 = por %p60, %p61
    %p63 = scmp.ne.s32.totalorder %s54, %s55
    %p64 = scmp.eq.s32.totalorder %s16, 0
    %p65 = por %p63, %p64
    %p66 = scmp.ne.s32.totalorder %s54, %s55
    %p67 = scmp.eq.s32.totalorder %s17, 1
    %p68 = por %p66, %p67
    %p70 = scmp.ne.s32.totalorder %s55, %s69
    %p71 = scmp.eq.s32.totalorder %s17, 0
    %p72 = por %p70, %p71
    %s74 = sadd.s32 %s73, 1
    %p77 = scmp.eq.s32.totalorder %s11, 1
    %p78 = scmp.ne.s32.totalorder %s73, %s75
    %p79 = scmp.eq.s32.totalorder %s11, 0
    %p80 = por %p78, %p79
    %p81 = scmp.ne.s32.totalorder %s73, %s75
    %p82 = scmp.eq.s32.totalorder %s16, 1
    %p83 = por %p81, %p82
    %p84 = scmp.ne.s32.totalorder %s75, %s76
    %p85 = scmp.eq.s32.totalorder %s16, 0
    %p86 = por %p84, %p85
    %p87 = scmp.ne.s32.totalorder %s75, %s76
    %p88 = scmp.eq.s32.totalorder %s17, 1
    %p89 = por %p87, %p88
    %p91 = scmp.ne.s32.totalorder %s76, %s90
    %p92 = scmp.eq.s32.totalorder %s17, 0
    %p93 = por %p91, %p92
    %s95 = sadd.s32 %s94, 1
    %p98 = scmp.eq.s32.totalorder %s11, 1
    %p99 = scmp.ne.s32.totalorder %s94, %s96
    %p100 = scmp.eq.s32.totalorder %s11, 0
    %p101 = por %p99, %p100
    %p102 = scmp.ne.s32.totalorder %s94, %s96
    %p103 = scmp.eq.s32.totalorder %s16, 1
    %p104 = por %p102, %p103
    %p105 = scmp.ne.s32.totalorder %s96, %s97
    %p106 = scmp.eq.s32.totalorder %s16, 0
    %p107 = por %p105, %p106
    %p108 = scmp.ne.s32.totalorder %s96, %s97
    %p109 = scmp.eq.s32.totalorder %s17, 1
    %p110 = por %p108, %p109
    %p112 = scmp.ne.s32.totalorder %s97, %s111
    %p113 = scmp.eq.s32.totalorder %s17, 0
    %p114 = por %p112, %p113
    %s115 = ssub.s32 %s18, %s30
    %s116 = ssub.s32 %s19, %s26
    %s117 = sor.u32 %s115, %s116
    %p118 = scmp.eq.s32.totalorder %s117, 0
    %s120 = sadd.s32 %s119, 1
    %s121 = scalar_select %p118, %s119, %s120
    %p124 = pneg %p118
    %p125 = scmp.eq.s32.totalorder %s11, 1
    %p126 = por %p124, %p125
    %p127 = scmp.ne.s32.totalorder %s119, %s122
    %p128 = scmp.eq.s32.totalorder %s11, 0
    %p129 = por %p127, %p128
    %p130 = scmp.ne.s32.totalorder %s119, %s122
    %p131 = scmp.eq.s32.totalorder %s16, 1
    %p132 = por %p130, %p131
    %p133 = scmp.ne.s32.totalorder %s122, %s123
    %p134 = scmp.eq.s32.totalorder %s16, 0
    %p135 = por %p133, %p134
    %p136 = scmp.ne.s32.totalorder %s122, %s123
    %p137 = scmp.eq.s32.totalorder %s17, 1
    %p138 = por %p136, %p137
    %p140 = scmp.ne.s32.totalorder %s123, %s139
    %p141 = scmp.eq.s32.totalorder %s17, 0
    %p142 = por %p140, %p141
    %s143 = ssub.s32 %s18, %s30
    %s144 = ssub.s32 %s19, %s26
    %s145 = sor.u32 %s143, %s144
    %p146 = scmp.eq.s32.totalorder %s145, 0
    %s148 = sadd.s32 %s147, 1
    %s149 = scalar_select %p146, %s147, %s148
    %p152 = pneg %p146
    %p153 = scmp.eq.s32.totalorder %s11, 1
    %p154 = por %p152, %p153
    %p155 = scmp.ne.s32.totalorder %s147, %s150
    %p156 = scmp.eq.s32.totalorder %s11, 0
    %p157 = por %p155, %p156
    %p158 = scmp.ne.s32.totalorder %s147, %s150
    %p159 = scmp.eq.s32.totalorder %s16, 1
    %p160 = por %p158, %p159
    %p161 = scmp.ne.s32.totalorder %s150, %s151
    %p162 = scmp.eq.s32.totalorder %s16, 0
    %p163 = por %p161, %p162
    %p164 = scmp.ne.s32.totalorder %s150, %s151
    %p165 = scmp.eq.s32.totalorder %s17, 1
    %p166 = por %p164, %p165
    %p168 = scmp.ne.s32.totalorder %s151, %s167
    %p169 = scmp.eq.s32.totalorder %s17, 0
    %p170 = por %p168, %p169
    %p171 = scmp.le.s32.totalorder 1, %s11
    %p172 = scmp.lt.s32.totalorder %s11, 3
    %p173 = pnand %p171, %p172
    %p174 = pneg %p173
    // Predicated region
    $region9: #{tpu_custom_call.1} parent=5 // pred_check
      _
    $region10: #{tpu_custom_call.1} parent=5 // pred_check_branch
      %176 = sbr.rel (%p173) target = $region12
    $region11: #{tpu_custom_call.1} parent=5 // pred_region
      %s177 = ssub.s32 %s11, 1
      // Predicated region
      $region13: #{tpu_custom_call.1} parent=11 // pred_check
        %p178 = pneg %p44
      $region14: #{tpu_custom_call.1} parent=11 // pred_check_branch
        %180 = sbr.rel (%p178) target = $region16
      $region15: #{tpu_custom_call.1} parent=11 // pred_region
        _
      $region16: #{tpu_custom_call.1} parent=11 // pred_fallthru
        _
      // Predicated region
      $region17: #{tpu_custom_call.1} parent=11 // pred_check
        %p181 = pneg %p65
      $region18: #{tpu_custom_call.1} parent=11 // pred_check_branch
        %183 = sbr.rel (%p181) target = $region20
      $region19: #{tpu_custom_call.1} parent=11 // pred_region
        _
      $region20: #{tpu_custom_call.1} parent=11 // pred_fallthru
        _
      // Predicated region
      $region21: #{tpu_custom_call.1} parent=11 // pred_check
        %p184 = pneg %p86
      $region22: #{tpu_custom_call.1} parent=11 // pred_check_branch
        %186 = sbr.rel (%p184) target = $region24
      $region23: #{tpu_custom_call.1} parent=11 // pred_region
        _
      $region24: #{tpu_custom_call.1} parent=11 // pred_fallthru
        _
      // Predicated region
      $region25: #{tpu_custom_call.1} parent=11 // pred_check
        %p187 = pneg %p107
      $region26: #{tpu_custom_call.1} parent=11 // pred_check_branch
        %189 = sbr.rel (%p187) target = $region28
      $region27: #{tpu_custom_call.1} parent=11 // pred_region
        _
      $region28: #{tpu_custom_call.1} parent=11 // pred_fallthru
        _
    $region12: #{tpu_custom_call.1} parent=5 // pred_fallthru
      _
    %p190 = scmp.lt.s32.totalorder %s11, 2
    // Predicated region
    $region29: #{tpu_custom_call.1} parent=5 // pred_check
      %p191 = pneg %p190
    $region30: #{tpu_custom_call.1} parent=5 // pred_check_branch
      %193 = sbr.rel (%p191) target = $region32
    $region31: #{tpu_custom_call.1} parent=5 // pred_region
      // Predicated region
      $region33: #{tpu_custom_call.1} parent=31 // pred_check
        %p194 = pneg %p129
      $region34: #{tpu_custom_call.1} parent=31 // pred_check_branch
        %196 = sbr.rel (%p194) target = $region36
      $region35: #{tpu_custom_call.1} parent=31 // pred_region
        %s197 = smul.u32 4, %s19
        %p198 = scmp.lt.s32.totalorder %s18, 1
        %s199 = scalar_select %p198, %s18, 1
        %p200 = scmp.lt.s32.totalorder %s197, 3
        %s201 = scalar_select %p200, %s197, 3
        %s202 = smul.addr %s199, 8
        %s203 = sadd.s32 %s201, %s202
        %s204 = smul.addr %s203, 8
        %s205 = scalar_lea.vmem %s4, %s204
        %s206 = smul.u32 4, %s19
      $region36: #{tpu_custom_call.1} parent=31 // pred_fallthru
        _
    $region32: #{tpu_custom_call.1} parent=5 // pred_fallthru
      _
    %p207 = scmp.le.s32.totalorder 1, %s11
    %p208 = scmp.lt.s32.totalorder %s11, 3
    %p209 = pnand %p207, %p208
    %p210 = pneg %p209
    // Predicated region
    $region37: #{tpu_custom_call.1} parent=5 // pred_check
      _
    $region38: #{tpu_custom_call.1} parent=5 // pred_check_branch
      %212 = sbr.rel (%p209) target = $region40
    $region39: #{tpu_custom_call.1} parent=5 // pred_region
      %s213 = ssub.s32 %s11, 1
      %p214 = pneg %p44
      %p215 = pneg %p41
      %p216 = pneg %p65
      %p217 = pneg %p62
      %p218 = pneg %p86
      %p219 = pneg %p83
      %p220 = pneg %p107
      %p221 = pneg %p104
      %s222 = smul.u32 4, %s21
      %p223 = scmp.lt.s32.totalorder %s20, 1
      %s224 = scalar_select %p223, %s20, 1
      %p225 = scmp.lt.s32.totalorder %s222, 3
      %s226 = scalar_select %p225, %s222, 3
      %s227 = smul.addr %s224, 8
      %s228 = sadd.s32 %s226, %s227
      %s229 = smul.addr %s228, 8
      %s230 = scalar_lea.vmem %s4, %s229
      %p231 = pneg %p135
      %p232 = pneg %p132
      %p233 = pneg %p163
      %p234 = pneg %p160
      %s235 = smul.u32 4, %s21
      %p236 = scmp.lt.s32.totalorder %s20, 1
      %s237 = scalar_select %p236, %s20, 1
      %p238 = scmp.lt.s32.totalorder %s235, 3
      %s239 = scalar_select %p238, %s235, 3
      %s240 = smul.addr %s237, 8
      %s241 = sadd.s32 %s239, %s240
      %s242 = smul.addr %s241, 8
      %s243 = scalar_lea.vmem %s5, %s242
      %s244 = smul.u32 4, %s21
      %p245 = scmp.lt.s32.totalorder %s20, 1
      %s246 = scalar_select %p245, %s20, 1
      %p247 = scmp.lt.s32.totalorder %s244, 3
      %s248 = scalar_select %p247, %s244, 3
      %s249 = smul.addr %s246, 8
      %s250 = sadd.s32 %s248, %s249
      %s251 = smul.addr %s250, 8
      %s252 = scalar_lea.vmem %s4, %s251
      %s253 = smul.u32 4, %s21
      %s254 = smul.u32 4, %s21
      %p255 = scmp.lt.s32.totalorder %s20, 1
      %s256 = scalar_select %p255, %s20, 1
      %p257 = scmp.lt.s32.totalorder %s254, 3
      %s258 = scalar_select %p257, %s254, 3
      %s259 = smul.addr %s256, 8
      %s260 = sadd.s32 %s258, %s259
      %s261 = smul.addr %s260, 8
      %s262 = scalar_lea.vmem %s5, %s261
      %s263 = smul.u32 4, %s21
      %v264 = vld [vmem:[%s252] sm:$0xff]
      %v265 = vld [vmem:[%s252 + $0x8] sm:$0xff]
      %v266 = vld [vmem:[%s252 + $0x10] sm:$0xff]
      %v267 = vld [vmem:[%s252 + $0x18] sm:$0xff]
      %v268 = vld [vmem:[%s252 + $0x20] sm:$0x1f]
      %v269 = vld [vmem:[%s252 + $0x28] sm:$0x1f]
      %v270 = vld [vmem:[%s252 + $0x30] sm:$0x1f]
      %v271 = vld [vmem:[%s252 + $0x38] sm:$0x1f]
      %v272 = vmul.f32 %v264, %v264
      %v273 = vmul.f32 %v265, %v265
      %v274 = vmul.f32 %v266, %v266
      %v275 = vmul.f32 %v267, %v267
      %v276 = vmul.f32 %v268, %v268
      %v277 = vmul.f32 %v269, %v269
      %v278 = vmul.f32 %v270, %v270
      %v279 = vmul.f32 %v271, %v271
      %v280 = vld [vmem:[%s0] sm:$0xff]
      %vm281 = vcmask 105472
      %v283 = vsel %vm281, %v280, 0
      %vm285 = vcmask 1044480
      %v287 = vsel %vm285, %v276, 0
      %v290 = vsel %vm285, %v277, 0
      %v293 = vsel %vm285, %v278, 0
      %v296 = vsel %vm285, %v279, 0
      %298 = vmatprep.subr.mxu0 0.0
      %299 = vmatpush1.msra.mxu0 0.0
      %300 = vmatprep.subr.mxu0 0.0
      %301 = vmatpush1.msra.mxu0 0.0
      %302 = vmatprep.subr.mxu0 0.0
      %303 = vmatpush1.msra.mxu0 0.0
      %304 = vmatprep.subr.mxu0 0.0
      %305 = vmatpush1.msra.mxu0 0.0
      %306 = vmatprep.subr.mxu0 0.0
      %307 = vmatpush1.msra.mxu0 0.0
      %308 = vmatprep.subr.mxu0 0.0
      %309 = vmatpush1.msra.mxu0 0.0
      %310 = vmatprep.subr.mxu0 0.0
      %311 = vmatpush1.msra.mxu0 0.0
      %312 = vmatprep.subr.mxu0 0.0
      %313 = vmatpush1.msra.mxu0 0.0
      %314 = vmatprep.subr.mxu0 0.0
      %315 = vmatpush1.msra.mxu0 0.0
      %316 = vmatprep.subr.mxu0 0.0
      %317 = vmatpush1.msra.mxu0 0.0
      %318 = vmatprep.subr.mxu0 0.0
      %319 = vmatpush1.msra.mxu0 0.0
      %320 = vmatprep.subr.mxu0 0.0
      %321 = vmatpush1.msra.mxu0 0.0
      %322 = vmatprep.subr.mxu0 0.0
      %323 = vmatpush1.msra.mxu0 0.0
      %324 = vmatprep.subr.mxu0 0.0
      %325 = vmatpush1.msra.mxu0 0.0
      %v326 = vand.u32 %v290, 4294901760
      %327 = vmatprep.subr.mxu0 %v326
      %v328 = vand.u32 %v287, 4294901760
      %329 = vmatpush1.msra.mxu0 %v328
      %v330 = vand.u32 %v273, 4294901760
      %331 = vmatprep.subr.mxu0 %v330
      %v332 = vand.u32 %v272, 4294901760
      %333 = vmatpush1.msra.mxu0 %v332
      %334 = vmatprep.subr.mxu0 0.0
      %335 = vmatpush2.msra.mxu0 0.0
      %336 = vmatprep.subr.mxu0 0.0
      %337 = vmatpush2.msra.mxu0 0.0
      %338 = vmatprep.subr.mxu0 0.0
      %339 = vmatpush2.msra.mxu0 0.0
      %340 = vmatprep.subr.mxu0 0.0
      %341 = vmatpush2.msra.mxu0 0.0
      %342 = vmatprep.subr.mxu0 0.0
      %343 = vmatpush2.msra.mxu0 0.0
      %344 = vmatprep.subr.mxu0 0.0
      %345 = vmatpush2.msra.mxu0 0.0
      %346 = vmatprep.subr.mxu0 0.0
      %347 = vmatpush2.msra.mxu0 0.0
      %348 = vmatprep.subr.mxu0 0.0
      %349 = vmatpush2.msra.mxu0 0.0
      %350 = vmatprep.subr.mxu0 0.0
      %351 = vmatpush2.msra.mxu0 0.0
      %352 = vmatprep.subr.mxu0 0.0
      %353 = vmatpush2.msra.mxu0 0.0
      %354 = vmatprep.subr.mxu0 0.0
      %355 = vmatpush2.msra.mxu0 0.0
      %356 = vmatprep.subr.mxu0 0.0
      %357 = vmatpush2.msra.mxu0 0.0
      %358 = vmatprep.subr.mxu0 0.0
      %359 = vmatpush2.msra.mxu0 0.0
      %360 = vmatprep.subr.mxu0 0.0
      %361 = vmatpush2.msra.mxu0 0.0
      %362 = vmatprep.subr.mxu0 0.0
      %363 = vmatpush2.msra.mxu0 0.0
      %364 = vmatprep.subr.mxu0 0.0
      %365 = vmatpush2.msra.mxu0 0.0
      %366 = vmatprep.mubr.f32.mxu0 0.0
      %v367 = vand.u32 %v283, 4294901760
      %v368 = vsub.f32 %v283, %v367
      %v369 = vand.u32 %v368, 4294901760
      %v370 = vsub.f32 %v368, %v369
      %v371 = vand.u32 %v370, 4294901760
      %372 = vmatmul.mubr.f32.gmra.mxu0 %v371
      %v373 = vpop.f32.mrf.mxu0
      %v374 = vadd.f32 0.0, %v373
      %v375 = vpop.f32.mrf.mxu0
      %v376 = vadd.f32 0.0, %v375
      %377 = vdwg.mxu0
      %378 = vmatprep.subr.mxu0 0.0
      %379 = vmatpush1.msra.mxu0 0.0
      %380 = vmatprep.subr.mxu0 0.0
      %381 = vmatpush1.msra.mxu0 0.0
      %382 = vmatprep.subr.mxu0 0.0
      %383 = vmatpush1.msra.mxu0 0.0
      %384 = vmatprep.subr.mxu0 0.0
      %385 = vmatpush1.msra.mxu0 0.0
      %386 = vmatprep.subr.mxu0 0.0
      %387 = vmatpush1.msra.mxu0 0.0
      %388 = vmatprep.subr.mxu0 0.0
      %389 = vmatpush1.msra.mxu0 0.0
      %390 = vmatprep.subr.mxu0 0.0
      %391 = vmatpush1.msra.mxu0 0.0
      %392 = vmatprep.subr.mxu0 0.0
      %393 = vmatpush1.msra.mxu0 0.0
      %394 = vmatprep.subr.mxu0 0.0
      %395 = vmatpush1.msra.mxu0 0.0
      %396 = vmatprep.subr.mxu0 0.0
      %397 = vmatpush1.msra.mxu0 0.0
      %398 = vmatprep.subr.mxu0 0.0
      %399 = vmatpush1.msra.mxu0 0.0
      %400 = vmatprep.subr.mxu0 0.0
      %401 = vmatpush1.msra.mxu0 0.0
      %402 = vmatprep.subr.mxu0 0.0
      %403 = vmatpush1.msra.mxu0 0.0
      %404 = vmatprep.subr.mxu0 0.0
      %405 = vmatpush1.msra.mxu0 0.0
      %v406 = vand.u32 %v290, 4294901760
      %v407 = vsub.f32 %v290, %v406
      %v408 = vand.u32 %v407, 4294901760
      %v409 = vsub.f32 %v407, %v408
      %v410 = vand.u32 %v409, 4294901760
      %411 = vmatprep.subr.mxu0 %v410
      %v412 = vand.u32 %v287, 4294901760
      %v413 = vsub.f32 %v287, %v412
      %v414 = vand.u32 %v413, 4294901760
      %v415 = vsub.f32 %v413, %v414
      %v416 = vand.u32 %v415, 4294901760
      %417 = vmatpush1.msra.mxu0 %v416
      %v418 = vand.u32 %v273, 4294901760
      %v419 = vsub.f32 %v273, %v418
      %v420 = vand.u32 %v419, 4294901760
      %v421 = vsub.f32 %v419, %v420
      %v422 = vand.u32 %v421, 4294901760
      %423 = vmatprep.subr.mxu0 %v422
      %v424 = vand.u32 %v272, 4294901760
      %v425 = vsub.f32 %v272, %v424
      %v426 = vand.u32 %v425, 4294901760
      %v427 = vsub.f32 %v425, %v426
      %v428 = vand.u32 %v427, 4294901760
      %429 = vmatpush1.msra.mxu0 %v428
      %430 = vmatprep.subr.mxu0 0.0
      %431 = vmatpush2.msra.mxu0 0.0
      %432 = vmatprep.subr.mxu0 0.0
      %433 = vmatpush2.msra.mxu0 0.0
      %434 = vmatprep.subr.mxu0 0.0
      %435 = vmatpush2.msra.mxu0 0.0
      %436 = vmatprep.subr.mxu0 0.0
      %437 = vmatpush2.msra.mxu0 0.0
      %438 = vmatprep.subr.mxu0 0.0
      %439 = vmatpush2.msra.mxu0 0.0
      %440 = vmatprep.subr.mxu0 0.0
      %441 = vmatpush2.msra.mxu0 0.0
      %442 = vmatprep.subr.mxu0 0.0
      %443 = vmatpush2.msra.mxu0 0.0
      %444 = vmatprep.subr.mxu0 0.0
      %445 = vmatpush2.msra.mxu0 0.0
      %446 = vmatprep.subr.mxu0 0.0
      %447 = vmatpush2.msra.mxu0 0.0
      %448 = vmatprep.subr.mxu0 0.0
      %449 = vmatpush2.msra.mxu0 0.0
      %450 = vmatprep.subr.mxu0 0.0
      %451 = vmatpush2.msra.mxu0 0.0
      %452 = vmatprep.subr.mxu0 0.0
      %453 = vmatpush2.msra.mxu0 0.0
      %454 = vmatprep.subr.mxu0 0.0
      %455 = vmatpush2.msra.mxu0 0.0
      %456 = vmatprep.subr.mxu0 0.0
      %457 = vmatpush2.msra.mxu0 0.0
      %458 = vmatprep.subr.mxu0 0.0
      %459 = vmatpush2.msra.mxu0 0.0
      %460 = vmatprep.subr.mxu0 0.0
      %461 = vmatpush2.msra.mxu0 0.0
      %462 = vmatprep.mubr.f32.mxu0 0.0
      %v463 = vand.u32 %v283, 4294901760
      %464 = vmatmul.mubr.f32.gmra.mxu0 %v463
      %v465 = vpop.f32.mrf.mxu0
      %v466 = vadd.f32 %v374, %v465
      %v467 = vpop.f32.mrf.mxu0
      %v468 = vadd.f32 %v376, %v467
      %469 = vdwg.mxu0
      %470 = vmatprep.subr.mxu0 0.0
      %471 = vmatpush1.msra.mxu0 0.0
      %472 = vmatprep.subr.mxu0 0.0
      %473 = vmatpush1.msra.mxu0 0.0
      %474 = vmatprep.subr.mxu0 0.0
      %475 = vmatpush1.msra.mxu0 0.0
      %476 = vmatprep.subr.mxu0 0.0
      %477 = vmatpush1.msra.mxu0 0.0
      %478 = vmatprep.subr.mxu0 0.0
      %479 = vmatpush1.msra.mxu0 0.0
      %480 = vmatprep.subr.mxu0 0.0
      %481 = vmatpush1.msra.mxu0 0.0
      %482 = vmatprep.subr.mxu0 0.0
      %483 = vmatpush1.msra.mxu0 0.0
      %484 = vmatprep.subr.mxu0 0.0
      %485 = vmatpush1.msra.mxu0 0.0
      %486 = vmatprep.subr.mxu0 0.0
      %487 = vmatpush1.msra.mxu0 0.0
      %488 = vmatprep.subr.mxu0 0.0
      %489 = vmatpush1.msra.mxu0 0.0
      %490 = vmatprep.subr.mxu0 0.0
      %491 = vmatpush1.msra.mxu0 0.0
      %492 = vmatprep.subr.mxu0 0.0
      %493 = vmatpush1.msra.mxu0 0.0
      %494 = vmatprep.subr.mxu0 0.0
      %495 = vmatpush1.msra.mxu0 0.0
      %496 = vmatprep.subr.mxu0 0.0
      %497 = vmatpush1.msra.mxu0 0.0
      %v498 = vand.u32 %v290, 4294901760
      %v499 = vsub.f32 %v290, %v498
      %500 = vmatprep.subr.mxu0 %v499
      %v501 = vand.u32 %v287, 4294901760
      %v502 = vsub.f32 %v287, %v501
      %503 = vmatpush1.msra.mxu0 %v502
      %v504 = vand.u32 %v273, 4294901760
      %v505 = vsub.f32 %v273, %v504
      %506 = vmatprep.subr.mxu0 %v505
      %v507 = vand.u32 %v272, 4294901760
      %v508 = vsub.f32 %v272, %v507
      %509 = vmatpush1.msra.mxu0 %v508
      %510 = vmatprep.subr.mxu0 0.0
      %511 = vmatpush2.msra.mxu0 0.0
      %512 = vmatprep.subr.mxu0 0.0
      %513 = vmatpush2.msra.mxu0 0.0
      %514 = vmatprep.subr.mxu0 0.0
      %515 = vmatpush2.msra.mxu0 0.0
      %516 = vmatprep.subr.mxu0 0.0
      %517 = vmatpush2.msra.mxu0 0.0
      %518 = vmatprep.subr.mxu0 0.0
      %519 = vmatpush2.msra.mxu0 0.0
      %520 = vmatprep.subr.mxu0 0.0
      %521 = vmatpush2.msra.mxu0 0.0
      %522 = vmatprep.subr.mxu0 0.0
      %523 = vmatpush2.msra.mxu0 0.0
      %524 = vmatprep.subr.mxu0 0.0
      %525 = vmatpush2.msra.mxu0 0.0
      %526 = vmatprep.subr.mxu0 0.0
      %527 = vmatpush2.msra.mxu0 0.0
      %528 = vmatprep.subr.mxu0 0.0
      %529 = vmatpush2.msra.mxu0 0.0
      %530 = vmatprep.subr.mxu0 0.0
      %531 = vmatpush2.msra.mxu0 0.0
      %532 = vmatprep.subr.mxu0 0.0
      %533 = vmatpush2.msra.mxu0 0.0
      %534 = vmatprep.subr.mxu0 0.0
      %535 = vmatpush2.msra.mxu0 0.0
      %536 = vmatprep.subr.mxu0 0.0
      %537 = vmatpush2.msra.mxu0 0.0
      %538 = vmatprep.subr.mxu0 0.0
      %539 = vmatpush2.msra.mxu0 0.0
      %540 = vmatprep.subr.mxu0 0.0
      %541 = vmatpush2.msra.mxu0 0.0
      %542 = vmatprep.mubr.f32.mxu0 0.0
      %v543 = vand.u32 %v283, 4294901760
      %v544 = vsub.f32 %v283, %v543
      %545 = vmatmul.mubr.f32.gmra.mxu0 %v544
      %v546 = vpop.f32.mrf.mxu0
      %v547 = vadd.f32 %v466, %v546
      %v548 = vpop.f32.mrf.mxu0
      %v549 = vadd.f32 %v468, %v548
      %550 = vdwg.mxu0
      %551 = vmatprep.subr.mxu0 0.0
      %552 = vmatpush1.msra.mxu0 0.0
      %553 = vmatprep.subr.mxu0 0.0
      %554 = vmatpush1.msra.mxu0 0.0
      %555 = vmatprep.subr.mxu0 0.0
      %556 = vmatpush1.msra.mxu0 0.0
      %557 = vmatprep.subr.mxu0 0.0
      %558 = vmatpush1.msra.mxu0 0.0
      %559 = vmatprep.subr.mxu0 0.0
      %560 = vmatpush1.msra.mxu0 0.0
      %561 = vmatprep.subr.mxu0 0.0
      %562 = vmatpush1.msra.mxu0 0.0
      %563 = vmatprep.subr.mxu0 0.0
      %564 = vmatpush1.msra.mxu0 0.0
      %565 = vmatprep.subr.mxu0 0.0
      %566 = vmatpush1.msra.mxu0 0.0
      %567 = vmatprep.subr.mxu0 0.0
      %568 = vmatpush1.msra.mxu0 0.0
      %569 = vmatprep.subr.mxu0 0.0
      %570 = vmatpush1.msra.mxu0 0.0
      %571 = vmatprep.subr.mxu0 0.0
      %572 = vmatpush1.msra.mxu0 0.0
      %573 = vmatprep.subr.mxu0 0.0
      %574 = vmatpush1.msra.mxu0 0.0
      %575 = vmatprep.subr.mxu0 0.0
      %576 = vmatpush1.msra.mxu0 0.0
      %577 = vmatprep.subr.mxu0 0.0
      %578 = vmatpush1.msra.mxu0 0.0
      %v579 = vand.u32 %v290, 4294901760
      %580 = vmatprep.subr.mxu0 %v579
      %v581 = vand.u32 %v287, 4294901760
      %582 = vmatpush1.msra.mxu0 %v581
      %v583 = vand.u32 %v273, 4294901760
      %584 = vmatprep.subr.mxu0 %v583
      %v585 = vand.u32 %v272, 4294901760
      %586 = vmatpush1.msra.mxu0 %v585
      %587 = vmatprep.subr.mxu0 0.0
      %588 = vmatpush2.msra.mxu0 0.0
      %589 = vmatprep.subr.mxu0 0.0
      %590 = vmatpush2.msra.mxu0 0.0
      %591 = vmatprep.subr.mxu0 0.0
      %592 = vmatpush2.msra.mxu0 0.0
      %593 = vmatprep.subr.mxu0 0.0
      %594 = vmatpush2.msra.mxu0 0.0
      %595 = vmatprep.subr.mxu0 0.0
      %596 = vmatpush2.msra.mxu0 0.0
      %597 = vmatprep.subr.mxu0 0.0
      %598 = vmatpush2.msra.mxu0 0.0
      %599 = vmatprep.subr.mxu0 0.0
      %600 = vmatpush2.msra.mxu0 0.0
      %601 = vmatprep.subr.mxu0 0.0
      %602 = vmatpush2.msra.mxu0 0.0
      %603 = vmatprep.subr.mxu0 0.0
      %604 = vmatpush2.msra.mxu0 0.0
      %605 = vmatprep.subr.mxu0 0.0
      %606 = vmatpush2.msra.mxu0 0.0
      %607 = vmatprep.subr.mxu0 0.0
      %608 = vmatpush2.msra.mxu0 0.0
      %609 = vmatprep.subr.mxu0 0.0
      %610 = vmatpush2.msra.mxu0 0.0
      %611 = vmatprep.subr.mxu0 0.0
      %612 = vmatpush2.msra.mxu0 0.0
      %613 = vmatprep.subr.mxu0 0.0
      %614 = vmatpush2.msra.mxu0 0.0
      %615 = vmatprep.subr.mxu0 0.0
      %616 = vmatpush2.msra.mxu0 0.0
      %617 = vmatprep.subr.mxu0 0.0
      %618 = vmatpush2.msra.mxu0 0.0
      %619 = vmatprep.mubr.f32.mxu0 0.0
      %v620 = vand.u32 %v283, 4294901760
      %v621 = vsub.f32 %v283, %v620
      %v622 = vand.u32 %v621, 4294901760
      %623 = vmatmul.mubr.f32.gmra.mxu0 %v622
      %v624 = vpop.f32.mrf.mxu0
      %v625 = vadd.f32 %v547, %v624
      %v626 = vpop.f32.mrf.mxu0
      %v627 = vadd.f32 %v549, %v626
      %628 = vdwg.mxu0
      %629 = vmatprep.subr.mxu0 0.0
      %630 = vmatpush1.msra.mxu0 0.0
      %631 = vmatprep.subr.mxu0 0.0
      %632 = vmatpush1.msra.mxu0 0.0
      %633 = vmatprep.subr.mxu0 0.0
      %634 = vmatpush1.msra.mxu0 0.0
      %635 = vmatprep.subr.mxu0 0.0
      %636 = vmatpush1.msra.mxu0 0.0
      %637 = vmatprep.subr.mxu0 0.0
      %638 = vmatpush1.msra.mxu0 0.0
      %639 = vmatprep.subr.mxu0 0.0
      %640 = vmatpush1.msra.mxu0 0.0
      %641 = vmatprep.subr.mxu0 0.0
      %642 = vmatpush1.msra.mxu0 0.0
      %643 = vmatprep.subr.mxu0 0.0
      %644 = vmatpush1.msra.mxu0 0.0
      %645 = vmatprep.subr.mxu0 0.0
      %646 = vmatpush1.msra.mxu0 0.0
      %647 = vmatprep.subr.mxu0 0.0
      %648 = vmatpush1.msra.mxu0 0.0
      %649 = vmatprep.subr.mxu0 0.0
      %650 = vmatpush1.msra.mxu0 0.0
      %651 = vmatprep.subr.mxu0 0.0
      %652 = vmatpush1.msra.mxu0 0.0
      %653 = vmatprep.subr.mxu0 0.0
      %654 = vmatpush1.msra.mxu0 0.0
      %655 = vmatprep.subr.mxu0 0.0
      %656 = vmatpush1.msra.mxu0 0.0
      %v657 = vand.u32 %v290, 4294901760
      %v658 = vsub.f32 %v290, %v657
      %v659 = vand.u32 %v658, 4294901760
      %660 = vmatprep.subr.mxu0 %v659
      %v661 = vand.u32 %v287, 4294901760
      %v662 = vsub.f32 %v287, %v661
      %v663 = vand.u32 %v662, 4294901760
      %664 = vmatpush1.msra.mxu0 %v663
      %v665 = vand.u32 %v273, 4294901760
      %v666 = vsub.f32 %v273, %v665
      %v667 = vand.u32 %v666, 4294901760
      %668 = vmatprep.subr.mxu0 %v667
      %v669 = vand.u32 %v272, 4294901760
      %v670 = vsub.f32 %v272, %v669
      %v671 = vand.u32 %v670, 4294901760
      %672 = vmatpush1.msra.mxu0 %v671
      %673 = vmatprep.subr.mxu0 0.0
      %674 = vmatpush2.msra.mxu0 0.0
      %675 = vmatprep.subr.mxu0 0.0
      %676 = vmatpush2.msra.mxu0 0.0
      %677 = vmatprep.subr.mxu0 0.0
      %678 = vmatpush2.msra.mxu0 0.0
      %679 = vmatprep.subr.mxu0 0.0
      %680 = vmatpush2.msra.mxu0 0.0
      %681 = vmatprep.subr.mxu0 0.0
      %682 = vmatpush2.msra.mxu0 0.0
      %683 = vmatprep.subr.mxu0 0.0
      %684 = vmatpush2.msra.mxu0 0.0
      %685 = vmatprep.subr.mxu0 0.0
      %686 = vmatpush2.msra.mxu0 0.0
      %687 = vmatprep.subr.mxu0 0.0
      %688 = vmatpush2.msra.mxu0 0.0
      %689 = vmatprep.subr.mxu0 0.0
      %690 = vmatpush2.msra.mxu0 0.0
      %691 = vmatprep.subr.mxu0 0.0
      %692 = vmatpush2.msra.mxu0 0.0
      %693 = vmatprep.subr.mxu0 0.0
      %694 = vmatpush2.msra.mxu0 0.0
      %695 = vmatprep.subr.mxu0 0.0
      %696 = vmatpush2.msra.mxu0 0.0
      %697 = vmatprep.subr.mxu0 0.0
      %698 = vmatpush2.msra.mxu0 0.0
      %699 = vmatprep.subr.mxu0 0.0
      %700 = vmatpush2.msra.mxu0 0.0
      %701 = vmatprep.subr.mxu0 0.0
      %702 = vmatpush2.msra.mxu0 0.0
      %703 = vmatprep.subr.mxu0 0.0
      %704 = vmatpush2.msra.mxu0 0.0
      %705 = vmatprep.mubr.f32.mxu0 0.0
      %v706 = vand.u32 %v283, 4294901760
      %707 = vmatmul.mubr.f32.gmra.mxu0 %v706
      %v708 = vpop.f32.mrf.mxu0
      %v709 = vadd.f32 %v625, %v708
      %v710 = vpop.f32.mrf.mxu0
      %v711 = vadd.f32 %v627, %v710
      %712 = vdwg.mxu0
      %713 = vmatprep.subr.mxu0 0.0
      %714 = vmatpush1.msra.mxu0 0.0
      %715 = vmatprep.subr.mxu0 0.0
      %716 = vmatpush1.msra.mxu0 0.0
      %717 = vmatprep.subr.mxu0 0.0
      %718 = vmatpush1.msra.mxu0 0.0
      %719 = vmatprep.subr.mxu0 0.0
      %720 = vmatpush1.msra.mxu0 0.0
      %721 = vmatprep.subr.mxu0 0.0
      %722 = vmatpush1.msra.mxu0 0.0
      %723 = vmatprep.subr.mxu0 0.0
      %724 = vmatpush1.msra.mxu0 0.0
      %725 = vmatprep.subr.mxu0 0.0
      %726 = vmatpush1.msra.mxu0 0.0
      %727 = vmatprep.subr.mxu0 0.0
      %728 = vmatpush1.msra.mxu0 0.0
      %729 = vmatprep.subr.mxu0 0.0
      %730 = vmatpush1.msra.mxu0 0.0
      %731 = vmatprep.subr.mxu0 0.0
      %732 = vmatpush1.msra.mxu0 0.0
      %733 = vmatprep.subr.mxu0 0.0
      %734 = vmatpush1.msra.mxu0 0.0
      %735 = vmatprep.subr.mxu0 0.0
      %736 = vmatpush1.msra.mxu0 0.0
      %737 = vmatprep.subr.mxu0 0.0
      %738 = vmatpush1.msra.mxu0 0.0
      %739 = vmatprep.subr.mxu0 0.0
      %740 = vmatpush1.msra.mxu0 0.0
      %v741 = vand.u32 %v290, 4294901760
      %742 = vmatprep.subr.mxu0 %v741
      %v743 = vand.u32 %v287, 4294901760
      %744 = vmatpush1.msra.mxu0 %v743
      %v745 = vand.u32 %v273, 4294901760
      %746 = vmatprep.subr.mxu0 %v745
      %v747 = vand.u32 %v272, 4294901760
      %748 = vmatpush1.msra.mxu0 %v747
      %749 = vmatprep.subr.mxu0 0.0
      %750 = vmatpush2.msra.mxu0 0.0
      %751 = vmatprep.subr.mxu0 0.0
      %752 = vmatpush2.msra.mxu0 0.0
      %753 = vmatprep.subr.mxu0 0.0
      %754 = vmatpush2.msra.mxu0 0.0
      %755 = vmatprep.subr.mxu0 0.0
      %756 = vmatpush2.msra.mxu0 0.0
      %757 = vmatprep.subr.mxu0 0.0
      %758 = vmatpush2.msra.mxu0 0.0
      %759 = vmatprep.subr.mxu0 0.0
      %760 = vmatpush2.msra.mxu0 0.0
      %761 = vmatprep.subr.mxu0 0.0
      %762 = vmatpush2.msra.mxu0 0.0
      %763 = vmatprep.subr.mxu0 0.0
      %764 = vmatpush2.msra.mxu0 0.0
      %765 = vmatprep.subr.mxu0 0.0
      %766 = vmatpush2.msra.mxu0 0.0
      %767 = vmatprep.subr.mxu0 0.0
      %768 = vmatpush2.msra.mxu0 0.0
      %769 = vmatprep.subr.mxu0 0.0
      %770 = vmatpush2.msra.mxu0 0.0
      %771 = vmatprep.subr.mxu0 0.0
      %772 = vmatpush2.msra.mxu0 0.0
      %773 = vmatprep.subr.mxu0 0.0
      %774 = vmatpush2.msra.mxu0 0.0
      %775 = vmatprep.subr.mxu0 0.0
      %776 = vmatpush2.msra.mxu0 0.0
      %777 = vmatprep.subr.mxu0 0.0
      %778 = vmatpush2.msra.mxu0 0.0
      %779 = vmatprep.subr.mxu0 0.0
      %780 = vmatpush2.msra.mxu0 0.0
      %781 = vmatprep.mubr.f32.mxu0 0.0
      %v782 = vand.u32 %v283, 4294901760
      %783 = vmatmul.mubr.f32.gmra.mxu0 %v782
      %v784 = vpop.f32.mrf.mxu0
      %v785 = vadd.f32 %v709, %v784
      %v786 = vpop.f32.mrf.mxu0
      %v787 = vadd.f32 %v711, %v786
      %788 = vdwg.mxu0
      %789 = vmatprep.subr.mxu0 0.0
      %790 = vmatpush1.msra.mxu0 0.0
      %791 = vmatprep.subr.mxu0 0.0
      %792 = vmatpush1.msra.mxu0 0.0
      %793 = vmatprep.subr.mxu0 0.0
      %794 = vmatpush1.msra.mxu0 0.0
      %795 = vmatprep.subr.mxu0 0.0
      %796 = vmatpush1.msra.mxu0 0.0
      %797 = vmatprep.subr.mxu0 0.0
      %798 = vmatpush1.msra.mxu0 0.0
      %799 = vmatprep.subr.mxu0 0.0
      %800 = vmatpush1.msra.mxu0 0.0
      %801 = vmatprep.subr.mxu0 0.0
      %802 = vmatpush1.msra.mxu0 0.0
      %803 = vmatprep.subr.mxu0 0.0
      %804 = vmatpush1.msra.mxu0 0.0
      %805 = vmatprep.subr.mxu0 0.0
      %806 = vmatpush1.msra.mxu0 0.0
      %807 = vmatprep.subr.mxu0 0.0
      %808 = vmatpush1.msra.mxu0 0.0
      %809 = vmatprep.subr.mxu0 0.0
      %810 = vmatpush1.msra.mxu0 0.0
      %811 = vmatprep.subr.mxu0 0.0
      %812 = vmatpush1.msra.mxu0 0.0
      %813 = vmatprep.subr.mxu0 0.0
      %814 = vmatpush1.msra.mxu0 0.0
      %815 = vmatprep.subr.mxu0 0.0
      %816 = vmatpush1.msra.mxu0 0.0
      %v817 = vand.u32 %v296, 4294901760
      %818 = vmatprep.subr.mxu0 %v817
      %v819 = vand.u32 %v293, 4294901760
      %820 = vmatpush1.msra.mxu0 %v819
      %v821 = vand.u32 %v275, 4294901760
      %822 = vmatprep.subr.mxu0 %v821
      %v823 = vand.u32 %v274, 4294901760
      %824 = vmatpush1.msra.mxu0 %v823
      %825 = vmatprep.subr.mxu0 0.0
      %826 = vmatpush2.msra.mxu0 0.0
      %827 = vmatprep.subr.mxu0 0.0
      %828 = vmatpush2.msra.mxu0 0.0
      %829 = vmatprep.subr.mxu0 0.0
      %830 = vmatpush2.msra.mxu0 0.0
      %831 = vmatprep.subr.mxu0 0.0
      %832 = vmatpush2.msra.mxu0 0.0
      %833 = vmatprep.subr.mxu0 0.0
      %834 = vmatpush2.msra.mxu0 0.0
      %835 = vmatprep.subr.mxu0 0.0
      %836 = vmatpush2.msra.mxu0 0.0
      %837 = vmatprep.subr.mxu0 0.0
      %838 = vmatpush2.msra.mxu0 0.0
      %839 = vmatprep.subr.mxu0 0.0
      %840 = vmatpush2.msra.mxu0 0.0
      %841 = vmatprep.subr.mxu0 0.0
      %842 = vmatpush2.msra.mxu0 0.0
      %843 = vmatprep.subr.mxu0 0.0
      %844 = vmatpush2.msra.mxu0 0.0
      %845 = vmatprep.subr.mxu0 0.0
      %846 = vmatpush2.msra.mxu0 0.0
      %847 = vmatprep.subr.mxu0 0.0
      %848 = vmatpush2.msra.mxu0 0.0
      %849 = vmatprep.subr.mxu0 0.0
      %850 = vmatpush2.msra.mxu0 0.0
      %851 = vmatprep.subr.mxu0 0.0
      %852 = vmatpush2.msra.mxu0 0.0
      %853 = vmatprep.subr.mxu0 0.0
      %854 = vmatpush2.msra.mxu0 0.0
      %855 = vmatprep.subr.mxu0 0.0
      %856 = vmatpush2.msra.mxu0 0.0
      %857 = vmatprep.mubr.f32.mxu0 0.0
      %v858 = vand.u32 %v283, 4294901760
      %v859 = vsub.f32 %v283, %v858
      %v860 = vand.u32 %v859, 4294901760
      %v861 = vsub.f32 %v859, %v860
      %v862 = vand.u32 %v861, 4294901760
      %863 = vmatmul.mubr.f32.gmra.mxu0 %v862
      %v864 = vpop.f32.mrf.mxu0
      %v865 = vadd.f32 0.0, %v864
      %v866 = vpop.f32.mrf.mxu0
      %v867 = vadd.f32 0.0, %v866
      %868 = vdwg.mxu0
      %869 = vmatprep.subr.mxu0 0.0
      %870 = vmatpush1.msra.mxu0 0.0
      %871 = vmatprep.subr.mxu0 0.0
      %872 = vmatpush1.msra.mxu0 0.0
      %873 = vmatprep.subr.mxu0 0.0
      %874 = vmatpush1.msra.mxu0 0.0
      %875 = vmatprep.subr.mxu0 0.0
      %876 = vmatpush1.msra.mxu0 0.0
      %877 = vmatprep.subr.mxu0 0.0
      %878 = vmatpush1.msra.mxu0 0.0
      %879 = vmatprep.subr.mxu0 0.0
      %880 = vmatpush1.msra.mxu0 0.0
      %881 = vmatprep.subr.mxu0 0.0
      %882 = vmatpush1.msra.mxu0 0.0
      %883 = vmatprep.subr.mxu0 0.0
      %884 = vmatpush1.msra.mxu0 0.0
      %885 = vmatprep.subr.mxu0 0.0
      %886 = vmatpush1.msra.mxu0 0.0
      %887 = vmatprep.subr.mxu0 0.0
      %888 = vmatpush1.msra.mxu0 0.0
      %889 = vmatprep.subr.mxu0 0.0
      %890 = vmatpush1.msra.mxu0 0.0
      %891 = vmatprep.subr.mxu0 0.0
      %892 = vmatpush1.msra.mxu0 0.0
      %893 = vmatprep.subr.mxu0 0.0
      %894 = vmatpush1.msra.mxu0 0.0
      %895 = vmatprep.subr.mxu0 0.0
      %896 = vmatpush1.msra.mxu0 0.0
      %v897 = vand.u32 %v296, 4294901760
      %v898 = vsub.f32 %v296, %v897
      %v899 = vand.u32 %v898, 4294901760
      %v900 = vsub.f32 %v898, %v899
      %v901 = vand.u32 %v900, 4294901760
      %902 = vmatprep.subr.mxu0 %v901
      %v903 = vand.u32 %v293, 4294901760
      %v904 = vsub.f32 %v293, %v903
      %v905 = vand.u32 %v904, 4294901760
      %v906 = vsub.f32 %v904, %v905
      %v907 = vand.u32 %v906, 4294901760
      %908 = vmatpush1.msra.mxu0 %v907
      %v909 = vand.u32 %v275, 4294901760
      %v910 = vsub.f32 %v275, %v909
      %v911 = vand.u32 %v910, 4294901760
      %v912 = vsub.f32 %v910, %v911
      %v913 = vand.u32 %v912, 4294901760
      %914 = vmatprep.subr.mxu0 %v913
      %v915 = vand.u32 %v274, 4294901760
      %v916 = vsub.f32 %v274, %v915
      %v917 = vand.u32 %v916, 4294901760
      %v918 = vsub.f32 %v916, %v917
      %v919 = vand.u32 %v918, 4294901760
      %920 = vmatpush1.msra.mxu0 %v919
      %921 = vmatprep.subr.mxu0 0.0
      %922 = vmatpush2.msra.mxu0 0.0
      %923 = vmatprep.subr.mxu0 0.0
      %924 = vmatpush2.msra.mxu0 0.0
      %925 = vmatprep.subr.mxu0 0.0
      %926 = vmatpush2.msra.mxu0 0.0
      %927 = vmatprep.subr.mxu0 0.0
      %928 = vmatpush2.msra.mxu0 0.0
      %929 = vmatprep.subr.mxu0 0.0
      %930 = vmatpush2.msra.mxu0 0.0
      %931 = vmatprep.subr.mxu0 0.0
      %932 = vmatpush2.msra.mxu0 0.0
      %933 = vmatprep.subr.mxu0 0.0
      %934 = vmatpush2.msra.mxu0 0.0
      %935 = vmatprep.subr.mxu0 0.0
      %936 = vmatpush2.msra.mxu0 0.0
      %937 = vmatprep.subr.mxu0 0.0
      %938 = vmatpush2.msra.mxu0 0.0
      %939 = vmatprep.subr.mxu0 0.0
      %940 = vmatpush2.msra.mxu0 0.0
      %941 = vmatprep.subr.mxu0 0.0
      %942 = vmatpush2.msra.mxu0 0.0
      %943 = vmatprep.subr.mxu0 0.0
      %944 = vmatpush2.msra.mxu0 0.0
      %945 = vmatprep.subr.mxu0 0.0
      %946 = vmatpush2.msra.mxu0 0.0
      %947 = vmatprep.subr.mxu0 0.0
      %948 = vmatpush2.msra.mxu0 0.0
      %949 = vmatprep.subr.mxu0 0.0
      %950 = vmatpush2.msra.mxu0 0.0
      %951 = vmatprep.subr.mxu0 0.0
      %952 = vmatpush2.msra.mxu0 0.0
      %953 = vmatprep.mubr.f32.mxu0 0.0
      %v954 = vand.u32 %v283, 4294901760
      %955 = vmatmul.mubr.f32.gmra.mxu0 %v954
      %v956 = vpop.f32.mrf.mxu0
      %v957 = vadd.f32 %v865, %v956
      %v958 = vpop.f32.mrf.mxu0
      %v959 = vadd.f32 %v867, %v958
      %960 = vdwg.mxu0
      %961 = vmatprep.subr.mxu0 0.0
      %962 = vmatpush1.msra.mxu0 0.0
      %963 = vmatprep.subr.mxu0 0.0
      %964 = vmatpush1.msra.mxu0 0.0
      %965 = vmatprep.subr.mxu0 0.0
      %966 = vmatpush1.msra.mxu0 0.0
      %967 = vmatprep.subr.mxu0 0.0
      %968 = vmatpush1.msra.mxu0 0.0
      %969 = vmatprep.subr.mxu0 0.0
      %970 = vmatpush1.msra.mxu0 0.0
      %971 = vmatprep.subr.mxu0 0.0
      %972 = vmatpush1.msra.mxu0 0.0
      %973 = vmatprep.subr.mxu0 0.0
      %974 = vmatpush1.msra.mxu0 0.0
      %975 = vmatprep.subr.mxu0 0.0
      %976 = vmatpush1.msra.mxu0 0.0
      %977 = vmatprep.subr.mxu0 0.0
      %978 = vmatpush1.msra.mxu0 0.0
      %979 = vmatprep.subr.mxu0 0.0
      %980 = vmatpush1.msra.mxu0 0.0
      %981 = vmatprep.subr.mxu0 0.0
      %982 = vmatpush1.msra.mxu0 0.0
      %983 = vmatprep.subr.mxu0 0.0
      %984 = vmatpush1.msra.mxu0 0.0
      %985 = vmatprep.subr.mxu0 0.0
      %986 = vmatpush1.msra.mxu0 0.0
      %987 = vmatprep.subr.mxu0 0.0
      %988 = vmatpush1.msra.mxu0 0.0
      %v989 = vand.u32 %v296, 4294901760
      %v990 = vsub.f32 %v296, %v989
      %991 = vmatprep.subr.mxu0 %v990
      %v992 = vand.u32 %v293, 4294901760
      %v993 = vsub.f32 %v293, %v992
      %994 = vmatpush1.msra.mxu0 %v993
      %v995 = vand.u32 %v275, 4294901760
      %v996 = vsub.f32 %v275, %v995
      %997 = vmatprep.subr.mxu0 %v996
      %v998 = vand.u32 %v274, 4294901760
      %v999 = vsub.f32 %v274, %v998
      %1000 = vmatpush1.msra.mxu0 %v999
      %1001 = vmatprep.subr.mxu0 0.0
      %1002 = vmatpush2.msra.mxu0 0.0
      %1003 = vmatprep.subr.mxu0 0.0
      %1004 = vmatpush2.msra.mxu0 0.0
      %1005 = vmatprep.subr.mxu0 0.0
      %1006 = vmatpush2.msra.mxu0 0.0
      %1007 = vmatprep.subr.mxu0 0.0
      %1008 = vmatpush2.msra.mxu0 0.0
      %1009 = vmatprep.subr.mxu0 0.0
      %1010 = vmatpush2.msra.mxu0 0.0
      %1011 = vmatprep.subr.mxu0 0.0
      %1012 = vmatpush2.msra.mxu0 0.0
      %1013 = vmatprep.subr.mxu0 0.0
      %1014 = vmatpush2.msra.mxu0 0.0
      %1015 = vmatprep.subr.mxu0 0.0
      %1016 = vmatpush2.msra.mxu0 0.0
      %1017 = vmatprep.subr.mxu0 0.0
      %1018 = vmatpush2.msra.mxu0 0.0
      %1019 = vmatprep.subr.mxu0 0.0
      %1020 = vmatpush2.msra.mxu0 0.0
      %1021 = vmatprep.subr.mxu0 0.0
      %1022 = vmatpush2.msra.mxu0 0.0
      %1023 = vmatprep.subr.mxu0 0.0
      %1024 = vmatpush2.msra.mxu0 0.0
      %1025 = vmatprep.subr.mxu0 0.0
      %1026 = vmatpush2.msra.mxu0 0.0
      %1027 = vmatprep.subr.mxu0 0.0
      %1028 = vmatpush2.msra.mxu0 0.0
      %1029 = vmatprep.subr.mxu0 0.0
      %1030 = vmatpush2.msra.mxu0 0.0
      %1031 = vmatprep.subr.mxu0 0.0
      %1032 = vmatpush2.msra.mxu0 0.0
      %1033 = vmatprep.mubr.f32.mxu0 0.0
      %v1034 = vand.u32 %v283, 4294901760
      %v1035 = vsub.f32 %v283, %v1034
      %1036 = vmatmul.mubr.f32.gmra.mxu0 %v1035
      %v1037 = vpop.f32.mrf.mxu0
      %v1038 = vadd.f32 %v957, %v1037
      %v1039 = vpop.f32.mrf.mxu0
      %v1040 = vadd.f32 %v959, %v1039
      %1041 = vdwg.mxu0
      %1042 = vmatprep.subr.mxu0 0.0
      %1043 = vmatpush1.msra.mxu0 0.0
      %1044 = vmatprep.subr.mxu0 0.0
      %1045 = vmatpush1.msra.mxu0 0.0
      %1046 = vmatprep.subr.mxu0 0.0
      %1047 = vmatpush1.msra.mxu0 0.0
      %1048 = vmatprep.subr.mxu0 0.0
      %1049 = vmatpush1.msra.mxu0 0.0
      %1050 = vmatprep.subr.mxu0 0.0
      %1051 = vmatpush1.msra.mxu0 0.0
      %1052 = vmatprep.subr.mxu0 0.0
      %1053 = vmatpush1.msra.mxu0 0.0
      %1054 = vmatprep.subr.mxu0 0.0
      %1055 = vmatpush1.msra.mxu0 0.0
      %1056 = vmatprep.subr.mxu0 0.0
      %1057 = vmatpush1.msra.mxu0 0.0
      %1058 = vmatprep.subr.mxu0 0.0
      %1059 = vmatpush1.msra.mxu0 0.0
      %1060 = vmatprep.subr.mxu0 0.0
      %1061 = vmatpush1.msra.mxu0 0.0
      %1062 = vmatprep.subr.mxu0 0.0
      %1063 = vmatpush1.msra.mxu0 0.0
      %1064 = vmatprep.subr.mxu0 0.0
      %1065 = vmatpush1.msra.mxu0 0.0
      %1066 = vmatprep.subr.mxu0 0.0
      %1067 = vmatpush1.msra.mxu0 0.0
      %1068 = vmatprep.subr.mxu0 0.0
      %1069 = vmatpush1.msra.mxu0 0.0
      %v1070 = vand.u32 %v296, 4294901760
      %1071 = vmatprep.subr.mxu0 %v1070
      %v1072 = vand.u32 %v293, 4294901760
      %1073 = vmatpush1.msra.mxu0 %v1072
      %v1074 = vand.u32 %v275, 4294901760
      %1075 = vmatprep.subr.mxu0 %v1074
      %v1076 = vand.u32 %v274, 4294901760
      %1077 = vmatpush1.msra.mxu0 %v1076
      %1078 = vmatprep.subr.mxu0 0.0
      %1079 = vmatpush2.msra.mxu0 0.0
      %1080 = vmatprep.subr.mxu0 0.0
      %1081 = vmatpush2.msra.mxu0 0.0
      %1082 = vmatprep.subr.mxu0 0.0
      %1083 = vmatpush2.msra.mxu0 0.0
      %1084 = vmatprep.subr.mxu0 0.0
      %1085 = vmatpush2.msra.mxu0 0.0
      %1086 = vmatprep.subr.mxu0 0.0
      %1087 = vmatpush2.msra.mxu0 0.0
      %1088 = vmatprep.subr.mxu0 0.0
      %1089 = vmatpush2.msra.mxu0 0.0
      %1090 = vmatprep.subr.mxu0 0.0
      %1091 = vmatpush2.msra.mxu0 0.0
      %1092 = vmatprep.subr.mxu0 0.0
      %1093 = vmatpush2.msra.mxu0 0.0
      %1094 = vmatprep.subr.mxu0 0.0
      %1095 = vmatpush2.msra.mxu0 0.0
      %1096 = vmatprep.subr.mxu0 0.0
      %1097 = vmatpush2.msra.mxu0 0.0
      %1098 = vmatprep.subr.mxu0 0.0
      %1099 = vmatpush2.msra.mxu0 0.0
      %1100 = vmatprep.subr.mxu0 0.0
      %1101 = vmatpush2.msra.mxu0 0.0
      %1102 = vmatprep.subr.mxu0 0.0
      %1103 = vmatpush2.msra.mxu0 0.0
      %1104 = vmatprep.subr.mxu0 0.0
      %1105 = vmatpush2.msra.mxu0 0.0
      %1106 = vmatprep.subr.mxu0 0.0
      %1107 = vmatpush2.msra.mxu0 0.0
      %1108 = vmatprep.subr.mxu0 0.0
      %1109 = vmatpush2.msra.mxu0 0.0
      %1110 = vmatprep.mubr.f32.mxu0 0.0
      %v1111 = vand.u32 %v283, 4294901760
      %v1112 = vsub.f32 %v283, %v1111
      %v1113 = vand.u32 %v1112, 4294901760
      %1114 = vmatmul.mubr.f32.gmra.mxu0 %v1113
      %v1115 = vpop.f32.mrf.mxu0
      %v1116 = vadd.f32 %v1038, %v1115
      %v1117 = vpop.f32.mrf.mxu0
      %v1118 = vadd.f32 %v1040, %v1117
      %1119 = vdwg.mxu0
      %1120 = vmatprep.subr.mxu0 0.0
      %1121 = vmatpush1.msra.mxu0 0.0
      %1122 = vmatprep.subr.mxu0 0.0
      %1123 = vmatpush1.msra.mxu0 0.0
      %1124 = vmatprep.subr.mxu0 0.0
      %1125 = vmatpush1.msra.mxu0 0.0
      %1126 = vmatprep.subr.mxu0 0.0
      %1127 = vmatpush1.msra.mxu0 0.0
      %1128 = vmatprep.subr.mxu0 0.0
      %1129 = vmatpush1.msra.mxu0 0.0
      %1130 = vmatprep.subr.mxu0 0.0
      %1131 = vmatpush1.msra.mxu0 0.0
      %1132 = vmatprep.subr.mxu0 0.0
      %1133 = vmatpush1.msra.mxu0 0.0
      %1134 = vmatprep.subr.mxu0 0.0
      %1135 = vmatpush1.msra.mxu0 0.0
      %1136 = vmatprep.subr.mxu0 0.0
      %1137 = vmatpush1.msra.mxu0 0.0
      %1138 = vmatprep.subr.mxu0 0.0
      %1139 = vmatpush1.msra.mxu0 0.0
      %1140 = vmatprep.subr.mxu0 0.0
      %1141 = vmatpush1.msra.mxu0 0.0
      %1142 = vmatprep.subr.mxu0 0.0
      %1143 = vmatpush1.msra.mxu0 0.0
      %1144 = vmatprep.subr.mxu0 0.0
      %1145 = vmatpush1.msra.mxu0 0.0
      %1146 = vmatprep.subr.mxu0 0.0
      %1147 = vmatpush1.msra.mxu0 0.0
      %v1148 = vand.u32 %v296, 4294901760
      %v1149 = vsub.f32 %v296, %v1148
      %v1150 = vand.u32 %v1149, 4294901760
      %1151 = vmatprep.subr.mxu0 %v1150
      %v1152 = vand.u32 %v293, 4294901760
      %v1153 = vsub.f32 %v293, %v1152
      %v1154 = vand.u32 %v1153, 4294901760
      %1155 = vmatpush1.msra.mxu0 %v1154
      %v1156 = vand.u32 %v275, 4294901760
      %v1157 = vsub.f32 %v275, %v1156
      %v1158 = vand.u32 %v1157, 4294901760
      %1159 = vmatprep.subr.mxu0 %v1158
      %v1160 = vand.u32 %v274, 4294901760
      %v1161 = vsub.f32 %v274, %v1160
      %v1162 = vand.u32 %v1161, 4294901760
      %1163 = vmatpush1.msra.mxu0 %v1162
      %1164 = vmatprep.subr.mxu0 0.0
      %1165 = vmatpush2.msra.mxu0 0.0
      %1166 = vmatprep.subr.mxu0 0.0
      %1167 = vmatpush2.msra.mxu0 0.0
      %1168 = vmatprep.subr.mxu0 0.0
      %1169 = vmatpush2.msra.mxu0 0.0
      %1170 = vmatprep.subr.mxu0 0.0
      %1171 = vmatpush2.msra.mxu0 0.0
      %1172 = vmatprep.subr.mxu0 0.0
      %1173 = vmatpush2.msra.mxu0 0.0
      %1174 = vmatprep.subr.mxu0 0.0
      %1175 = vmatpush2.msra.mxu0 0.0
      %1176 = vmatprep.subr.mxu0 0.0
      %1177 = vmatpush2.msra.mxu0 0.0
      %1178 = vmatprep.subr.mxu0 0.0
      %1179 = vmatpush2.msra.mxu0 0.0
      %1180 = vmatprep.subr.mxu0 0.0
      %1181 = vmatpush2.msra.mxu0 0.0
      %1182 = vmatprep.subr.mxu0 0.0
      %1183 = vmatpush2.msra.mxu0 0.0
      %1184 = vmatprep.subr.mxu0 0.0
      %1185 = vmatpush2.msra.mxu0 0.0
      %1186 = vmatprep.subr.mxu0 0.0
      %1187 = vmatpush2.msra.mxu0 0.0
      %1188 = vmatprep.subr.mxu0 0.0
      %1189 = vmatpush2.msra.mxu0 0.0
      %1190 = vmatprep.subr.mxu0 0.0
      %1191 = vmatpush2.msra.mxu0 0.0
      %1192 = vmatprep.subr.mxu0 0.0
      %1193 = vmatpush2.msra.mxu0 0.0
      %1194 = vmatprep.subr.mxu0 0.0
      %1195 = vmatpush2.msra.mxu0 0.0
      %1196 = vmatprep.mubr.f32.mxu0 0.0
      %v1197 = vand.u32 %v283, 4294901760
      %1198 = vmatmul.mubr.f32.gmra.mxu0 %v1197
      %v1199 = vpop.f32.mrf.mxu0
      %v1200 = vadd.f32 %v1116, %v1199
      %v1201 = vpop.f32.mrf.mxu0
      %v1202 = vadd.f32 %v1118, %v1201
      %1203 = vdwg.mxu0
      %1204 = vmatprep.subr.mxu0 0.0
      %1205 = vmatpush1.msra.mxu0 0.0
      %1206 = vmatprep.subr.mxu0 0.0
      %1207 = vmatpush1.msra.mxu0 0.0
      %1208 = vmatprep.subr.mxu0 0.0
      %1209 = vmatpush1.msra.mxu0 0.0
      %1210 = vmatprep.subr.mxu0 0.0
      %1211 = vmatpush1.msra.mxu0 0.0
      %1212 = vmatprep.subr.mxu0 0.0
      %1213 = vmatpush1.msra.mxu0 0.0
      %1214 = vmatprep.subr.mxu0 0.0
      %1215 = vmatpush1.msra.mxu0 0.0
      %1216 = vmatprep.subr.mxu0 0.0
      %1217 = vmatpush1.msra.mxu0 0.0
      %1218 = vmatprep.subr.mxu0 0.0
      %1219 = vmatpush1.msra.mxu0 0.0
      %1220 = vmatprep.subr.mxu0 0.0
      %1221 = vmatpush1.msra.mxu0 0.0
      %1222 = vmatprep.subr.mxu0 0.0
      %1223 = vmatpush1.msra.mxu0 0.0
      %1224 = vmatprep.subr.mxu0 0.0
      %1225 = vmatpush1.msra.mxu0 0.0
      %1226 = vmatprep.subr.mxu0 0.0
      %1227 = vmatpush1.msra.mxu0 0.0
      %1228 = vmatprep.subr.mxu0 0.0
      %1229 = vmatpush1.msra.mxu0 0.0
      %1230 = vmatprep.subr.mxu0 0.0
      %1231 = vmatpush1.msra.mxu0 0.0
      %v1232 = vand.u32 %v296, 4294901760
      %1233 = vmatprep.subr.mxu0 %v1232
      %v1234 = vand.u32 %v293, 4294901760
      %1235 = vmatpush1.msra.mxu0 %v1234
      %v1236 = vand.u32 %v275, 4294901760
      %1237 = vmatprep.subr.mxu0 %v1236
      %v1238 = vand.u32 %v274, 4294901760
      %1239 = vmatpush1.msra.mxu0 %v1238
      %1240 = vmatprep.subr.mxu0 0.0
      %1241 = vmatpush2.msra.mxu0 0.0
      %1242 = vmatprep.subr.mxu0 0.0
      %1243 = vmatpush2.msra.mxu0 0.0
      %1244 = vmatprep.subr.mxu0 0.0
      %1245 = vmatpush2.msra.mxu0 0.0
      %1246 = vmatprep.subr.mxu0 0.0
      %1247 = vmatpush2.msra.mxu0 0.0
      %1248 = vmatprep.subr.mxu0 0.0
      %1249 = vmatpush2.msra.mxu0 0.0
      %1250 = vmatprep.subr.mxu0 0.0
      %1251 = vmatpush2.msra.mxu0 0.0
      %1252 = vmatprep.subr.mxu0 0.0
      %1253 = vmatpush2.msra.mxu0 0.0
      %1254 = vmatprep.subr.mxu0 0.0
      %1255 = vmatpush2.msra.mxu0 0.0
      %1256 = vmatprep.subr.mxu0 0.0
      %1257 = vmatpush2.msra.mxu0 0.0
      %1258 = vmatprep.subr.mxu0 0.0
      %1259 = vmatpush2.msra.mxu0 0.0
      %1260 = vmatprep.subr.mxu0 0.0
      %1261 = vmatpush2.msra.mxu0 0.0
      %1262 = vmatprep.subr.mxu0 0.0
      %1263 = vmatpush2.msra.mxu0 0.0
      %1264 = vmatprep.subr.mxu0 0.0
      %1265 = vmatpush2.msra.mxu0 0.0
      %1266 = vmatprep.subr.mxu0 0.0
      %1267 = vmatpush2.msra.mxu0 0.0
      %1268 = vmatprep.subr.mxu0 0.0
      %1269 = vmatpush2.msra.mxu0 0.0
      %1270 = vmatprep.subr.mxu0 0.0
      %1271 = vmatpush2.msra.mxu0 0.0
      %1272 = vmatprep.mubr.f32.mxu0 0.0
      %v1273 = vand.u32 %v283, 4294901760
      %1274 = vmatmul.mubr.f32.gmra.mxu0 %v1273
      %v1275 = vpop.f32.mrf.mxu0
      %v1276 = vadd.f32 %v1200, %v1275
      %v1277 = vpop.f32.mrf.mxu0
      %v1278 = vadd.f32 %v1202, %v1277
      %1279 = vdwg.mxu0
      %v1280 = vadd.f32 %v785, 1e-12
      %v1281 = vadd.f32 %v787, 1e-12
      %v1282 = vadd.f32 %v1276, 1e-12
      %v1283 = vadd.f32 %v1278, 1e-12
      %v1284 = vrsqrt.pop %v1280
      %v1285 = vrsqrt.pop %v1281
      %v1286 = vrsqrt.pop %v1282
      %v1287 = vrsqrt.pop %v1283
      %v1288 = vmul.f32 %v785, %v1284
      %v1289 = vmul.f32 %v787, %v1285
      %v1290 = vmul.f32 %v1276, %v1286
      %v1291 = vmul.f32 %v1278, %v1287
      %v1292 = vadd.f32 %v1288, 1e-06
      %v1293 = vadd.f32 %v1289, 1e-06
      %v1294 = vadd.f32 %v1290, 1e-06
      %v1295 = vadd.f32 %v1291, 1e-06
      %v1296 = vld [vmem:[%s2] sm:$0xff]
      %1298 = vset.pattern.permute.xlu0 0
      %1299 = vperm.xlu0 %1298, %v1296
      %v1300 = vpop.permute.xlu0 %1299
      %v1302 = vsub.f32 %v1292, %v1300
      %v1303 = vsub.f32 %v1293, %v1300
      %v1304 = vsub.f32 %v1294, %v1300
      %v1305 = vsub.f32 %v1295, %v1300
      %vm1306 = vcmp.gt.f32.partialorder %v1302, 20.0
      %vm1307 = vcmp.gt.f32.partialorder %v1303, 20.0
      %vm1308 = vcmp.gt.f32.partialorder %v1304, 20.0
      %vm1309 = vcmp.gt.f32.partialorder %v1305, 20.0
      %v1310 = vmin.f32 %v1302, 20.0
      %v1311 = vmin.f32 %v1303, 20.0
      %v1312 = vmin.f32 %v1304, 20.0
      %v1313 = vmin.f32 %v1305, 20.0
      %v1314 = vmul.f32 %v1310, 1.442695
      %v1315 = vpow.pop %v1314
      %v1316 = vmul.f32 %v1311, 1.442695
      %v1317 = vpow.pop %v1316
      %v1318 = vmul.f32 %v1312, 1.442695
      %v1319 = vpow.pop %v1318
      %v1320 = vmul.f32 %v1313, 1.442695
      %v1321 = vpow.pop %v1320
      %v1322 = vadd.f32 %v1315, 1.0
      %v1323 = vlog2.pop %v1322
      %v1324 = vmul.f32 %v1323, 0.6931472
      %v1325 = vmul.f32 -0.5, %v1315
      %v1326 = vadd.f32 %v1325, 1.0
      %v1327 = vmul.f32 %v1326, %v1315
      %v1328 = vand.u32 2147483647, %v1315
      %vm1329 = vcmp.lt.f32.partialorder %v1328, 0.0004427343
      %v1330 = vsel %vm1329, %v1327, %v1324
      %v1331 = vadd.f32 %v1317, 1.0
      %v1332 = vlog2.pop %v1331
      %v1333 = vmul.f32 %v1332, 0.6931472
      %v1334 = vmul.f32 -0.5, %v1317
      %v1335 = vadd.f32 %v1334, 1.0
      %v1336 = vmul.f32 %v1335, %v1317
      %v1337 = vand.u32 2147483647, %v1317
      %vm1338 = vcmp.lt.f32.partialorder %v1337, 0.0004427343
      %v1339 = vsel %vm1338, %v1336, %v1333
      %v1340 = vadd.f32 %v1319, 1.0
      %v1341 = vlog2.pop %v1340
      %v1342 = vmul.f32 %v1341, 0.6931472
      %v1343 = vmul.f32 -0.5, %v1319
      %v1344 = vadd.f32 %v1343, 1.0
      %v1345 = vmul.f32 %v1344, %v1319
      %v1346 = vand.u32 2147483647, %v1319
      %vm1347 = vcmp.lt.f32.partialorder %v1346, 0.0004427343
      %v1348 = vsel %vm1347, %v1345, %v1342
      %v1349 = vadd.f32 %v1321, 1.0
      %v1350 = vlog2.pop %v1349
      %v1351 = vmul.f32 %v1350, 0.6931472
      %v1352 = vmul.f32 -0.5, %v1321
      %v1353 = vadd.f32 %v1352, 1.0
      %v1354 = vmul.f32 %v1353, %v1321
      %v1355 = vand.u32 2147483647, %v1321
      %vm1356 = vcmp.lt.f32.partialorder %v1355, 0.0004427343
      %v1357 = vsel %vm1356, %v1354, %v1351
      %v1358 = vsel %vm1306, %v1302, %v1330
      %v1359 = vsel %vm1307, %v1303, %v1339
      %v1360 = vsel %vm1308, %v1304, %v1348
      %v1361 = vsel %vm1309, %v1305, %v1357
      %v1362 = vmul.f32 %v1358, %v1284
      %v1363 = vmul.f32 %v1359, %v1285
      %v1364 = vmul.f32 %v1360, %v1286
      %v1365 = vmul.f32 %v1361, %v1287
      %v1366 = vld [vmem:[%s1] sm:$0xff]
      %v1367 = vld [vmem:[%s1 + $0x8] sm:$0x1f]
      %vm1368 = vcmask 64512
      %v1370 = vsel %vm1368, %v1366, 0
      %v1373 = vsel %vm1368, %v1367, 0
      %1375 = vmatprep.subr.mxu0 0.0
      %1376 = vmatpush1.msra.mxu0 0.0
      %1377 = vmatprep.subr.mxu0 0.0
      %1378 = vmatpush1.msra.mxu0 0.0
      %1379 = vmatprep.subr.mxu0 0.0
      %1380 = vmatpush1.msra.mxu0 0.0
      %1381 = vmatprep.subr.mxu0 0.0
      %1382 = vmatpush1.msra.mxu0 0.0
      %1383 = vmatprep.subr.mxu0 0.0
      %1384 = vmatpush1.msra.mxu0 0.0
      %1385 = vmatprep.subr.mxu0 0.0
      %1386 = vmatpush1.msra.mxu0 0.0
      %1387 = vmatprep.subr.mxu0 0.0
      %1388 = vmatpush1.msra.mxu0 0.0
      %1389 = vmatprep.subr.mxu0 0.0
      %1390 = vmatpush1.msra.mxu0 0.0
      %1391 = vmatprep.subr.mxu0 0.0
      %1392 = vmatpush1.msra.mxu0 0.0
      %1393 = vmatprep.subr.mxu0 0.0
      %1394 = vmatpush1.msra.mxu0 0.0
      %1395 = vmatprep.subr.mxu0 0.0
      %1396 = vmatpush1.msra.mxu0 0.0
      %1397 = vmatprep.subr.mxu0 0.0
      %1398 = vmatpush1.msra.mxu0 0.0
      %1399 = vmatprep.subr.mxu0 0.0
      %1400 = vmatpush1.msra.mxu0 0.0
      %1401 = vmatprep.subr.mxu0 0.0
      %1402 = vmatpush1.msra.mxu0 0.0
      %1403 = vmatprep.subr.mxu0 0.0
      %1404 = vmatpush1.msra.mxu0 0.0
      %v1405 = vand.u32 %v1363, 4294901760
      %1406 = vmatprep.subr.mxu0 %v1405
      %v1407 = vand.u32 %v1362, 4294901760
      %1408 = vmatpush1.msra.mxu0 %v1407
      %1409 = vmatprep.subr.mxu0 0.0
      %1410 = vmatpush2.msra.mxu0 0.0
      %1411 = vmatprep.subr.mxu0 0.0
      %1412 = vmatpush2.msra.mxu0 0.0
      %1413 = vmatprep.subr.mxu0 0.0
      %1414 = vmatpush2.msra.mxu0 0.0
      %1415 = vmatprep.subr.mxu0 0.0
      %1416 = vmatpush2.msra.mxu0 0.0
      %1417 = vmatprep.subr.mxu0 0.0
      %1418 = vmatpush2.msra.mxu0 0.0
      %1419 = vmatprep.subr.mxu0 0.0
      %1420 = vmatpush2.msra.mxu0 0.0
      %1421 = vmatprep.subr.mxu0 0.0
      %1422 = vmatpush2.msra.mxu0 0.0
      %1423 = vmatprep.subr.mxu0 0.0
      %1424 = vmatpush2.msra.mxu0 0.0
      %1425 = vmatprep.subr.mxu0 0.0
      %1426 = vmatpush2.msra.mxu0 0.0
      %1427 = vmatprep.subr.mxu0 0.0
      %1428 = vmatpush2.msra.mxu0 0.0
      %1429 = vmatprep.subr.mxu0 0.0
      %1430 = vmatpush2.msra.mxu0 0.0
      %1431 = vmatprep.subr.mxu0 0.0
      %1432 = vmatpush2.msra.mxu0 0.0
      %1433 = vmatprep.subr.mxu0 0.0
      %1434 = vmatpush2.msra.mxu0 0.0
      %1435 = vmatprep.subr.mxu0 0.0
      %1436 = vmatpush2.msra.mxu0 0.0
      %1437 = vmatprep.subr.mxu0 0.0
      %1438 = vmatpush2.msra.mxu0 0.0
      %1439 = vmatprep.subr.mxu0 0.0
      %1440 = vmatpush2.msra.mxu0 0.0
      %1441 = vmatprep.mubr.f32.mxu0 0.0
      %v1442 = vand.u32 %v1370, 4294901760
      %v1443 = vsub.f32 %v1370, %v1442
      %v1444 = vand.u32 %v1443, 4294901760
      %v1445 = vsub.f32 %v1443, %v1444
      %v1446 = vand.u32 %v1445, 4294901760
      %1447 = vmatmul.mubr.f32.gmra.mxu0 %v1446
      %v1448 = vpop.f32.mrf.mxu0
      %v1449 = vadd.f32 0.0, %v1448
      %v1450 = vpop.f32.mrf.mxu0
      %v1451 = vadd.f32 0.0, %v1450
      %1452 = vmatprep.mubr.f32.mxu0 0.0
      %v1453 = vand.u32 %v1373, 4294901760
      %v1454 = vsub.f32 %v1373, %v1453
      %v1455 = vand.u32 %v1454, 4294901760
      %v1456 = vsub.f32 %v1454, %v1455
      %v1457 = vand.u32 %v1456, 4294901760
      %1458 = vmatmul.mubr.f32.gmra.mxu0 %v1457
      %v1459 = vpop.f32.mrf.mxu0
      %v1460 = vadd.f32 0.0, %v1459
      %v1461 = vpop.f32.mrf.mxu0
      %v1462 = vadd.f32 0.0, %v1461
      %1463 = vdwg.mxu0
      %1464 = vmatprep.subr.mxu0 0.0
      %1465 = vmatpush1.msra.mxu0 0.0
      %1466 = vmatprep.subr.mxu0 0.0
      %1467 = vmatpush1.msra.mxu0 0.0
      %1468 = vmatprep.subr.mxu0 0.0
      %1469 = vmatpush1.msra.mxu0 0.0
      %1470 = vmatprep.subr.mxu0 0.0
      %1471 = vmatpush1.msra.mxu0 0.0
      %1472 = vmatprep.subr.mxu0 0.0
      %1473 = vmatpush1.msra.mxu0 0.0
      %1474 = vmatprep.subr.mxu0 0.0
      %1475 = vmatpush1.msra.mxu0 0.0
      %1476 = vmatprep.subr.mxu0 0.0
      %1477 = vmatpush1.msra.mxu0 0.0
      %1478 = vmatprep.subr.mxu0 0.0
      %1479 = vmatpush1.msra.mxu0 0.0
      %1480 = vmatprep.subr.mxu0 0.0
      %1481 = vmatpush1.msra.mxu0 0.0
      %1482 = vmatprep.subr.mxu0 0.0
      %1483 = vmatpush1.msra.mxu0 0.0
      %1484 = vmatprep.subr.mxu0 0.0
      %1485 = vmatpush1.msra.mxu0 0.0
      %1486 = vmatprep.subr.mxu0 0.0
      %1487 = vmatpush1.msra.mxu0 0.0
      %1488 = vmatprep.subr.mxu0 0.0
      %1489 = vmatpush1.msra.mxu0 0.0
      %1490 = vmatprep.subr.mxu0 0.0
      %1491 = vmatpush1.msra.mxu0 0.0
      %1492 = vmatprep.subr.mxu0 0.0
      %1493 = vmatpush1.msra.mxu0 0.0
      %v1494 = vand.u32 %v1363, 4294901760
      %v1495 = vsub.f32 %v1363, %v1494
      %v1496 = vand.u32 %v1495, 4294901760
      %v1497 = vsub.f32 %v1495, %v1496
      %v1498 = vand.u32 %v1497, 4294901760
      %1499 = vmatprep.subr.mxu0 %v1498
      %v1500 = vand.u32 %v1362, 4294901760
      %v1501 = vsub.f32 %v1362, %v1500
      %v1502 = vand.u32 %v1501, 4294901760
      %v1503 = vsub.f32 %v1501, %v1502
      %v1504 = vand.u32 %v1503, 4294901760
      %1505 = vmatpush1.msra.mxu0 %v1504
      %1506 = vmatprep.subr.mxu0 0.0
      %1507 = vmatpush2.msra.mxu0 0.0
      %1508 = vmatprep.subr.mxu0 0.0
      %1509 = vmatpush2.msra.mxu0 0.0
      %1510 = vmatprep.subr.mxu0 0.0
      %1511 = vmatpush2.msra.mxu0 0.0
      %1512 = vmatprep.subr.mxu0 0.0
      %1513 = vmatpush2.msra.mxu0 0.0
      %1514 = vmatprep.subr.mxu0 0.0
      %1515 = vmatpush2.msra.mxu0 0.0
      %1516 = vmatprep.subr.mxu0 0.0
      %1517 = vmatpush2.msra.mxu0 0.0
      %1518 = vmatprep.subr.mxu0 0.0
      %1519 = vmatpush2.msra.mxu0 0.0
      %1520 = vmatprep.subr.mxu0 0.0
      %1521 = vmatpush2.msra.mxu0 0.0
      %1522 = vmatprep.subr.mxu0 0.0
      %1523 = vmatpush2.msra.mxu0 0.0
      %1524 = vmatprep.subr.mxu0 0.0
      %1525 = vmatpush2.msra.mxu0 0.0
      %1526 = vmatprep.subr.mxu0 0.0
      %1527 = vmatpush2.msra.mxu0 0.0
      %1528 = vmatprep.subr.mxu0 0.0
      %1529 = vmatpush2.msra.mxu0 0.0
      %1530 = vmatprep.subr.mxu0 0.0
      %1531 = vmatpush2.msra.mxu0 0.0
      %1532 = vmatprep.subr.mxu0 0.0
      %1533 = vmatpush2.msra.mxu0 0.0
      %1534 = vmatprep.subr.mxu0 0.0
      %1535 = vmatpush2.msra.mxu0 0.0
      %1536 = vmatprep.subr.mxu0 0.0
      %1537 = vmatpush2.msra.mxu0 0.0
      %1538 = vmatprep.mubr.f32.mxu0 0.0
      %v1539 = vand.u32 %v1370, 4294901760
      %1540 = vmatmul.mubr.f32.gmra.mxu0 %v1539
      %v1541 = vpop.f32.mrf.mxu0
      %v1542 = vadd.f32 %v1449, %v1541
      %v1543 = vpop.f32.mrf.mxu0
      %v1544 = vadd.f32 %v1451, %v1543
      %1545 = vmatprep.mubr.f32.mxu0 0.0
      %v1546 = vand.u32 %v1373, 4294901760
      %1547 = vmatmul.mubr.f32.gmra.mxu0 %v1546
      %v1548 = vpop.f32.mrf.mxu0
      %v1549 = vadd.f32 %v1460, %v1548
      %v1550 = vpop.f32.mrf.mxu0
      %v1551 = vadd.f32 %v1462, %v1550
      %1552 = vdwg.mxu0
      %1553 = vmatprep.subr.mxu0 0.0
      %1554 = vmatpush1.msra.mxu0 0.0
      %1555 = vmatprep.subr.mxu0 0.0
      %1556 = vmatpush1.msra.mxu0 0.0
      %1557 = vmatprep.subr.mxu0 0.0
      %1558 = vmatpush1.msra.mxu0 0.0
      %1559 = vmatprep.subr.mxu0 0.0
      %1560 = vmatpush1.msra.mxu0 0.0
      %1561 = vmatprep.subr.mxu0 0.0
      %1562 = vmatpush1.msra.mxu0 0.0
      %1563 = vmatprep.subr.mxu0 0.0
      %1564 = vmatpush1.msra.mxu0 0.0
      %1565 = vmatprep.subr.mxu0 0.0
      %1566 = vmatpush1.msra.mxu0 0.0
      %1567 = vmatprep.subr.mxu0 0.0
      %1568 = vmatpush1.msra.mxu0 0.0
      %1569 = vmatprep.subr.mxu0 0.0
      %1570 = vmatpush1.msra.mxu0 0.0
      %1571 = vmatprep.subr.mxu0 0.0
      %1572 = vmatpush1.msra.mxu0 0.0
      %1573 = vmatprep.subr.mxu0 0.0
      %1574 = vmatpush1.msra.mxu0 0.0
      %1575 = vmatprep.subr.mxu0 0.0
      %1576 = vmatpush1.msra.mxu0 0.0
      %1577 = vmatprep.subr.mxu0 0.0
      %1578 = vmatpush1.msra.mxu0 0.0
      %1579 = vmatprep.subr.mxu0 0.0
      %1580 = vmatpush1.msra.mxu0 0.0
      %1581 = vmatprep.subr.mxu0 0.0
      %1582 = vmatpush1.msra.mxu0 0.0
      %v1583 = vand.u32 %v1363, 4294901760
      %v1584 = vsub.f32 %v1363, %v1583
      %1585 = vmatprep.subr.mxu0 %v1584
      %v1586 = vand.u32 %v1362, 4294901760
      %v1587 = vsub.f32 %v1362, %v1586
      %1588 = vmatpush1.msra.mxu0 %v1587
      %1589 = vmatprep.subr.mxu0 0.0
      %1590 = vmatpush2.msra.mxu0 0.0
      %1591 = vmatprep.subr.mxu0 0.0
      %1592 = vmatpush2.msra.mxu0 0.0
      %1593 = vmatprep.subr.mxu0 0.0
      %1594 = vmatpush2.msra.mxu0 0.0
      %1595 = vmatprep.subr.mxu0 0.0
      %1596 = vmatpush2.msra.mxu0 0.0
      %1597 = vmatprep.subr.mxu0 0.0
      %1598 = vmatpush2.msra.mxu0 0.0
      %1599 = vmatprep.subr.mxu0 0.0
      %1600 = vmatpush2.msra.mxu0 0.0
      %1601 = vmatprep.subr.mxu0 0.0
      %1602 = vmatpush2.msra.mxu0 0.0
      %1603 = vmatprep.subr.mxu0 0.0
      %1604 = vmatpush2.msra.mxu0 0.0
      %1605 = vmatprep.subr.mxu0 0.0
      %1606 = vmatpush2.msra.mxu0 0.0
      %1607 = vmatprep.subr.mxu0 0.0
      %1608 = vmatpush2.msra.mxu0 0.0
      %1609 = vmatprep.subr.mxu0 0.0
      %1610 = vmatpush2.msra.mxu0 0.0
      %1611 = vmatprep.subr.mxu0 0.0
      %1612 = vmatpush2.msra.mxu0 0.0
      %1613 = vmatprep.subr.mxu0 0.0
      %1614 = vmatpush2.msra.mxu0 0.0
      %1615 = vmatprep.subr.mxu0 0.0
      %1616 = vmatpush2.msra.mxu0 0.0
      %1617 = vmatprep.subr.mxu0 0.0
      %1618 = vmatpush2.msra.mxu0 0.0
      %1619 = vmatprep.subr.mxu0 0.0
      %1620 = vmatpush2.msra.mxu0 0.0
      %1621 = vmatprep.mubr.f32.mxu0 0.0
      %v1622 = vand.u32 %v1370, 4294901760
      %v1623 = vsub.f32 %v1370, %v1622
      %1624 = vmatmul.mubr.f32.gmra.mxu0 %v1623
      %v1625 = vpop.f32.mrf.mxu0
      %v1626 = vadd.f32 %v1542, %v1625
      %v1627 = vpop.f32.mrf.mxu0
      %v1628 = vadd.f32 %v1544, %v1627
      %1629 = vmatprep.mubr.f32.mxu0 0.0
      %v1630 = vand.u32 %v1373, 4294901760
      %v1631 = vsub.f32 %v1373, %v1630
      %1632 = vmatmul.mubr.f32.gmra.mxu0 %v1631
      %v1633 = vpop.f32.mrf.mxu0
      %v1634 = vadd.f32 %v1549, %v1633
      %v1635 = vpop.f32.mrf.mxu0
      %v1636 = vadd.f32 %v1551, %v1635
      %1637 = vdwg.mxu0
      %1638 = vmatprep.subr.mxu0 0.0
      %1639 = vmatpush1.msra.mxu0 0.0
      %1640 = vmatprep.subr.mxu0 0.0
      %1641 = vmatpush1.msra.mxu0 0.0
      %1642 = vmatprep.subr.mxu0 0.0
      %1643 = vmatpush1.msra.mxu0 0.0
      %1644 = vmatprep.subr.mxu0 0.0
      %1645 = vmatpush1.msra.mxu0 0.0
      %1646 = vmatprep.subr.mxu0 0.0
      %1647 = vmatpush1.msra.mxu0 0.0
      %1648 = vmatprep.subr.mxu0 0.0
      %1649 = vmatpush1.msra.mxu0 0.0
      %1650 = vmatprep.subr.mxu0 0.0
      %1651 = vmatpush1.msra.mxu0 0.0
      %1652 = vmatprep.subr.mxu0 0.0
      %1653 = vmatpush1.msra.mxu0 0.0
      %1654 = vmatprep.subr.mxu0 0.0
      %1655 = vmatpush1.msra.mxu0 0.0
      %1656 = vmatprep.subr.mxu0 0.0
      %1657 = vmatpush1.msra.mxu0 0.0
      %1658 = vmatprep.subr.mxu0 0.0
      %1659 = vmatpush1.msra.mxu0 0.0
      %1660 = vmatprep.subr.mxu0 0.0
      %1661 = vmatpush1.msra.mxu0 0.0
      %1662 = vmatprep.subr.mxu0 0.0
      %1663 = vmatpush1.msra.mxu0 0.0
      %1664 = vmatprep.subr.mxu0 0.0
      %1665 = vmatpush1.msra.mxu0 0.0
      %1666 = vmatprep.subr.mxu0 0.0
      %1667 = vmatpush1.msra.mxu0 0.0
      %v1668 = vand.u32 %v1363, 4294901760
      %1669 = vmatprep.subr.mxu0 %v1668
      %v1670 = vand.u32 %v1362, 4294901760
      %1671 = vmatpush1.msra.mxu0 %v1670
      %1672 = vmatprep.subr.mxu0 0.0
      %1673 = vmatpush2.msra.mxu0 0.0
      %1674 = vmatprep.subr.mxu0 0.0
      %1675 = vmatpush2.msra.mxu0 0.0
      %1676 = vmatprep.subr.mxu0 0.0
      %1677 = vmatpush2.msra.mxu0 0.0
      %1678 = vmatprep.subr.mxu0 0.0
      %1679 = vmatpush2.msra.mxu0 0.0
      %1680 = vmatprep.subr.mxu0 0.0
      %1681 = vmatpush2.msra.mxu0 0.0
      %1682 = vmatprep.subr.mxu0 0.0
      %1683 = vmatpush2.msra.mxu0 0.0
      %1684 = vmatprep.subr.mxu0 0.0
      %1685 = vmatpush2.msra.mxu0 0.0
      %1686 = vmatprep.subr.mxu0 0.0
      %1687 = vmatpush2.msra.mxu0 0.0
      %1688 = vmatprep.subr.mxu0 0.0
      %1689 = vmatpush2.msra.mxu0 0.0
      %1690 = vmatprep.subr.mxu0 0.0
      %1691 = vmatpush2.msra.mxu0 0.0
      %1692 = vmatprep.subr.mxu0 0.0
      %1693 = vmatpush2.msra.mxu0 0.0
      %1694 = vmatprep.subr.mxu0 0.0
      %1695 = vmatpush2.msra.mxu0 0.0
      %1696 = vmatprep.subr.mxu0 0.0
      %1697 = vmatpush2.msra.mxu0 0.0
      %1698 = vmatprep.subr.mxu0 0.0
      %1699 = vmatpush2.msra.mxu0 0.0
      %1700 = vmatprep.subr.mxu0 0.0
      %1701 = vmatpush2.msra.mxu0 0.0
      %1702 = vmatprep.subr.mxu0 0.0
      %1703 = vmatpush2.msra.mxu0 0.0
      %1704 = vmatprep.mubr.f32.mxu0 0.0
      %v1705 = vand.u32 %v1370, 4294901760
      %v1706 = vsub.f32 %v1370, %v1705
      %v1707 = vand.u32 %v1706, 4294901760
      %1708 = vmatmul.mubr.f32.gmra.mxu0 %v1707
      %v1709 = vpop.f32.mrf.mxu0
      %v1710 = vadd.f32 %v1626, %v1709
      %v1711 = vpop.f32.mrf.mxu0
      %v1712 = vadd.f32 %v1628, %v1711
      %1713 = vmatprep.mubr.f32.mxu0 0.0
      %v1714 = vand.u32 %v1373, 4294901760
      %v1715 = vsub.f32 %v1373, %v1714
      %v1716 = vand.u32 %v1715, 4294901760
      %1717 = vmatmul.mubr.f32.gmra.mxu0 %v1716
      %v1718 = vpop.f32.mrf.mxu0
      %v1719 = vadd.f32 %v1634, %v1718
      %v1720 = vpop.f32.mrf.mxu0
      %v1721 = vadd.f32 %v1636, %v1720
      %1722 = vdwg.mxu0
      %1723 = vmatprep.subr.mxu0 0.0
      %1724 = vmatpush1.msra.mxu0 0.0
      %1725 = vmatprep.subr.mxu0 0.0
      %1726 = vmatpush1.msra.mxu0 0.0
      %1727 = vmatprep.subr.mxu0 0.0
      %1728 = vmatpush1.msra.mxu0 0.0
      %1729 = vmatprep.subr.mxu0 0.0
      %1730 = vmatpush1.msra.mxu0 0.0
      %1731 = vmatprep.subr.mxu0 0.0
      %1732 = vmatpush1.msra.mxu0 0.0
      %1733 = vmatprep.subr.mxu0 0.0
      %1734 = vmatpush1.msra.mxu0 0.0
      %1735 = vmatprep.subr.mxu0 0.0
      %1736 = vmatpush1.msra.mxu0 0.0
      %1737 = vmatprep.subr.mxu0 0.0
      %1738 = vmatpush1.msra.mxu0 0.0
      %1739 = vmatprep.subr.mxu0 0.0
      %1740 = vmatpush1.msra.mxu0 0.0
      %1741 = vmatprep.subr.mxu0 0.0
      %1742 = vmatpush1.msra.mxu0 0.0
      %1743 = vmatprep.subr.mxu0 0.0
      %1744 = vmatpush1.msra.mxu0 0.0
      %1745 = vmatprep.subr.mxu0 0.0
      %1746 = vmatpush1.msra.mxu0 0.0
      %1747 = vmatprep.subr.mxu0 0.0
      %1748 = vmatpush1.msra.mxu0 0.0
      %1749 = vmatprep.subr.mxu0 0.0
      %1750 = vmatpush1.msra.mxu0 0.0
      %1751 = vmatprep.subr.mxu0 0.0
      %1752 = vmatpush1.msra.mxu0 0.0
      %v1753 = vand.u32 %v1363, 4294901760
      %v1754 = vsub.f32 %v1363, %v1753
      %v1755 = vand.u32 %v1754, 4294901760
      %1756 = vmatprep.subr.mxu0 %v1755
      %v1757 = vand.u32 %v1362, 4294901760
      %v1758 = vsub.f32 %v1362, %v1757
      %v1759 = vand.u32 %v1758, 4294901760
      %1760 = vmatpush1.msra.mxu0 %v1759
      %1761 = vmatprep.subr.mxu0 0.0
      %1762 = vmatpush2.msra.mxu0 0.0
      %1763 = vmatprep.subr.mxu0 0.0
      %1764 = vmatpush2.msra.mxu0 0.0
      %1765 = vmatprep.subr.mxu0 0.0
      %1766 = vmatpush2.msra.mxu0 0.0
      %1767 = vmatprep.subr.mxu0 0.0
      %1768 = vmatpush2.msra.mxu0 0.0
      %1769 = vmatprep.subr.mxu0 0.0
      %1770 = vmatpush2.msra.mxu0 0.0
      %1771 = vmatprep.subr.mxu0 0.0
      %1772 = vmatpush2.msra.mxu0 0.0
      %1773 = vmatprep.subr.mxu0 0.0
      %1774 = vmatpush2.msra.mxu0 0.0
      %1775 = vmatprep.subr.mxu0 0.0
      %1776 = vmatpush2.msra.mxu0 0.0
      %1777 = vmatprep.subr.mxu0 0.0
      %1778 = vmatpush2.msra.mxu0 0.0
      %1779 = vmatprep.subr.mxu0 0.0
      %1780 = vmatpush2.msra.mxu0 0.0
      %1781 = vmatprep.subr.mxu0 0.0
      %1782 = vmatpush2.msra.mxu0 0.0
      %1783 = vmatprep.subr.mxu0 0.0
      %1784 = vmatpush2.msra.mxu0 0.0
      %1785 = vmatprep.subr.mxu0 0.0
      %1786 = vmatpush2.msra.mxu0 0.0
      %1787 = vmatprep.subr.mxu0 0.0
      %1788 = vmatpush2.msra.mxu0 0.0
      %1789 = vmatprep.subr.mxu0 0.0
      %1790 = vmatpush2.msra.mxu0 0.0
      %1791 = vmatprep.subr.mxu0 0.0
      %1792 = vmatpush2.msra.mxu0 0.0
      %1793 = vmatprep.mubr.f32.mxu0 0.0
      %v1794 = vand.u32 %v1370, 4294901760
      %1795 = vmatmul.mubr.f32.gmra.mxu0 %v1794
      %v1796 = vpop.f32.mrf.mxu0
      %v1797 = vadd.f32 %v1710, %v1796
      %v1798 = vpop.f32.mrf.mxu0
      %v1799 = vadd.f32 %v1712, %v1798
      %1800 = vmatprep.mubr.f32.mxu0 0.0
      %v1801 = vand.u32 %v1373, 4294901760
      %1802 = vmatmul.mubr.f32.gmra.mxu0 %v1801
      %v1803 = vpop.f32.mrf.mxu0
      %v1804 = vadd.f32 %v1719, %v1803
      %v1805 = vpop.f32.mrf.mxu0
      %v1806 = vadd.f32 %v1721, %v1805
      %1807 = vdwg.mxu0
      %1808 = vmatprep.subr.mxu0 0.0
      %1809 = vmatpush1.msra.mxu0 0.0
      %1810 = vmatprep.subr.mxu0 0.0
      %1811 = vmatpush1.msra.mxu0 0.0
      %1812 = vmatprep.subr.mxu0 0.0
      %1813 = vmatpush1.msra.mxu0 0.0
      %1814 = vmatprep.subr.mxu0 0.0
      %1815 = vmatpush1.msra.mxu0 0.0
      %1816 = vmatprep.subr.mxu0 0.0
      %1817 = vmatpush1.msra.mxu0 0.0
      %1818 = vmatprep.subr.mxu0 0.0
      %1819 = vmatpush1.msra.mxu0 0.0
      %1820 = vmatprep.subr.mxu0 0.0
      %1821 = vmatpush1.msra.mxu0 0.0
      %1822 = vmatprep.subr.mxu0 0.0
      %1823 = vmatpush1.msra.mxu0 0.0
      %1824 = vmatprep.subr.mxu0 0.0
      %1825 = vmatpush1.msra.mxu0 0.0
      %1826 = vmatprep.subr.mxu0 0.0
      %1827 = vmatpush1.msra.mxu0 0.0
      %1828 = vmatprep.subr.mxu0 0.0
      %1829 = vmatpush1.msra.mxu0 0.0
      %1830 = vmatprep.subr.mxu0 0.0
      %1831 = vmatpush1.msra.mxu0 0.0
      %1832 = vmatprep.subr.mxu0 0.0
      %1833 = vmatpush1.msra.mxu0 0.0
      %1834 = vmatprep.subr.mxu0 0.0
      %1835 = vmatpush1.msra.mxu0 0.0
      %1836 = vmatprep.subr.mxu0 0.0
      %1837 = vmatpush1.msra.mxu0 0.0
      %v1838 = vand.u32 %v1363, 4294901760
      %1839 = vmatprep.subr.mxu0 %v1838
      %v1840 = vand.u32 %v1362, 4294901760
      %1841 = vmatpush1.msra.mxu0 %v1840
      %1842 = vmatprep.subr.mxu0 0.0
      %1843 = vmatpush2.msra.mxu0 0.0
      %1844 = vmatprep.subr.mxu0 0.0
      %1845 = vmatpush2.msra.mxu0 0.0
      %1846 = vmatprep.subr.mxu0 0.0
      %1847 = vmatpush2.msra.mxu0 0.0
      %1848 = vmatprep.subr.mxu0 0.0
      %1849 = vmatpush2.msra.mxu0 0.0
      %1850 = vmatprep.subr.mxu0 0.0
      %1851 = vmatpush2.msra.mxu0 0.0
      %1852 = vmatprep.subr.mxu0 0.0
      %1853 = vmatpush2.msra.mxu0 0.0
      %1854 = vmatprep.subr.mxu0 0.0
      %1855 = vmatpush2.msra.mxu0 0.0
      %1856 = vmatprep.subr.mxu0 0.0
      %1857 = vmatpush2.msra.mxu0 0.0
      %1858 = vmatprep.subr.mxu0 0.0
      %1859 = vmatpush2.msra.mxu0 0.0
      %1860 = vmatprep.subr.mxu0 0.0
      %1861 = vmatpush2.msra.mxu0 0.0
      %1862 = vmatprep.subr.mxu0 0.0
      %1863 = vmatpush2.msra.mxu0 0.0
      %1864 = vmatprep.subr.mxu0 0.0
      %1865 = vmatpush2.msra.mxu0 0.0
      %1866 = vmatprep.subr.mxu0 0.0
      %1867 = vmatpush2.msra.mxu0 0.0
      %1868 = vmatprep.subr.mxu0 0.0
      %1869 = vmatpush2.msra.mxu0 0.0
      %1870 = vmatprep.subr.mxu0 0.0
      %1871 = vmatpush2.msra.mxu0 0.0
      %1872 = vmatprep.subr.mxu0 0.0
      %1873 = vmatpush2.msra.mxu0 0.0
      %1874 = vmatprep.mubr.f32.mxu0 0.0
      %v1875 = vand.u32 %v1370, 4294901760
      %1876 = vmatmul.mubr.f32.gmra.mxu0 %v1875
      %v1877 = vpop.f32.mrf.mxu0
      %v1878 = vadd.f32 %v1797, %v1877
      %v1879 = vpop.f32.mrf.mxu0
      %v1880 = vadd.f32 %v1799, %v1879
      %1881 = vmatprep.mubr.f32.mxu0 0.0
      %v1882 = vand.u32 %v1373, 4294901760
      %1883 = vmatmul.mubr.f32.gmra.mxu0 %v1882
      %v1884 = vpop.f32.mrf.mxu0
      %v1885 = vadd.f32 %v1804, %v1884
      %v1886 = vpop.f32.mrf.mxu0
      %v1887 = vadd.f32 %v1806, %v1886
      %1888 = vdwg.mxu0
      %1889 = vmatprep.subr.mxu0 0.0
      %1890 = vmatpush1.msra.mxu0 0.0
      %1891 = vmatprep.subr.mxu0 0.0
      %1892 = vmatpush1.msra.mxu0 0.0
      %1893 = vmatprep.subr.mxu0 0.0
      %1894 = vmatpush1.msra.mxu0 0.0
      %1895 = vmatprep.subr.mxu0 0.0
      %1896 = vmatpush1.msra.mxu0 0.0
      %1897 = vmatprep.subr.mxu0 0.0
      %1898 = vmatpush1.msra.mxu0 0.0
      %1899 = vmatprep.subr.mxu0 0.0
      %1900 = vmatpush1.msra.mxu0 0.0
      %1901 = vmatprep.subr.mxu0 0.0
      %1902 = vmatpush1.msra.mxu0 0.0
      %1903 = vmatprep.subr.mxu0 0.0
      %1904 = vmatpush1.msra.mxu0 0.0
      %1905 = vmatprep.subr.mxu0 0.0
      %1906 = vmatpush1.msra.mxu0 0.0
      %1907 = vmatprep.subr.mxu0 0.0
      %1908 = vmatpush1.msra.mxu0 0.0
      %1909 = vmatprep.subr.mxu0 0.0
      %1910 = vmatpush1.msra.mxu0 0.0
      %1911 = vmatprep.subr.mxu0 0.0
      %1912 = vmatpush1.msra.mxu0 0.0
      %1913 = vmatprep.subr.mxu0 0.0
      %1914 = vmatpush1.msra.mxu0 0.0
      %1915 = vmatprep.subr.mxu0 0.0
      %1916 = vmatpush1.msra.mxu0 0.0
      %1917 = vmatprep.subr.mxu0 0.0
      %1918 = vmatpush1.msra.mxu0 0.0
      %v1919 = vand.u32 %v1365, 4294901760
      %1920 = vmatprep.subr.mxu0 %v1919
      %v1921 = vand.u32 %v1364, 4294901760
      %1922 = vmatpush1.msra.mxu0 %v1921
      %1923 = vmatprep.subr.mxu0 0.0
      %1924 = vmatpush2.msra.mxu0 0.0
      %1925 = vmatprep.subr.mxu0 0.0
      %1926 = vmatpush2.msra.mxu0 0.0
      %1927 = vmatprep.subr.mxu0 0.0
      %1928 = vmatpush2.msra.mxu0 0.0
      %1929 = vmatprep.subr.mxu0 0.0
      %1930 = vmatpush2.msra.mxu0 0.0
      %1931 = vmatprep.subr.mxu0 0.0
      %1932 = vmatpush2.msra.mxu0 0.0
      %1933 = vmatprep.subr.mxu0 0.0
      %1934 = vmatpush2.msra.mxu0 0.0
      %1935 = vmatprep.subr.mxu0 0.0
      %1936 = vmatpush2.msra.mxu0 0.0
      %1937 = vmatprep.subr.mxu0 0.0
      %1938 = vmatpush2.msra.mxu0 0.0
      %1939 = vmatprep.subr.mxu0 0.0
      %1940 = vmatpush2.msra.mxu0 0.0
      %1941 = vmatprep.subr.mxu0 0.0
      %1942 = vmatpush2.msra.mxu0 0.0
      %1943 = vmatprep.subr.mxu0 0.0
      %1944 = vmatpush2.msra.mxu0 0.0
      %1945 = vmatprep.subr.mxu0 0.0
      %1946 = vmatpush2.msra.mxu0 0.0
      %1947 = vmatprep.subr.mxu0 0.0
      %1948 = vmatpush2.msra.mxu0 0.0
      %1949 = vmatprep.subr.mxu0 0.0
      %1950 = vmatpush2.msra.mxu0 0.0
      %1951 = vmatprep.subr.mxu0 0.0
      %1952 = vmatpush2.msra.mxu0 0.0
      %1953 = vmatprep.subr.mxu0 0.0
      %1954 = vmatpush2.msra.mxu0 0.0
      %1955 = vmatprep.mubr.f32.mxu0 0.0
      %v1956 = vand.u32 %v1370, 4294901760
      %v1957 = vsub.f32 %v1370, %v1956
      %v1958 = vand.u32 %v1957, 4294901760
      %v1959 = vsub.f32 %v1957, %v1958
      %v1960 = vand.u32 %v1959, 4294901760
      %1961 = vmatmul.mubr.f32.gmra.mxu0 %v1960
      %v1962 = vpop.f32.mrf.mxu0
      %v1963 = vadd.f32 0.0, %v1962
      %v1964 = vpop.f32.mrf.mxu0
      %v1965 = vadd.f32 0.0, %v1964
      %1966 = vmatprep.mubr.f32.mxu0 0.0
      %v1967 = vand.u32 %v1373, 4294901760
      %v1968 = vsub.f32 %v1373, %v1967
      %v1969 = vand.u32 %v1968, 4294901760
      %v1970 = vsub.f32 %v1968, %v1969
      %v1971 = vand.u32 %v1970, 4294901760
      %1972 = vmatmul.mubr.f32.gmra.mxu0 %v1971
      %v1973 = vpop.f32.mrf.mxu0
      %v1974 = vadd.f32 0.0, %v1973
      %v1975 = vpop.f32.mrf.mxu0
      %v1976 = vadd.f32 0.0, %v1975
      %1977 = vdwg.mxu0
      %1978 = vmatprep.subr.mxu0 0.0
      %1979 = vmatpush1.msra.mxu0 0.0
      %1980 = vmatprep.subr.mxu0 0.0
      %1981 = vmatpush1.msra.mxu0 0.0
      %1982 = vmatprep.subr.mxu0 0.0
      %1983 = vmatpush1.msra.mxu0 0.0
      %1984 = vmatprep.subr.mxu0 0.0
      %1985 = vmatpush1.msra.mxu0 0.0
      %1986 = vmatprep.subr.mxu0 0.0
      %1987 = vmatpush1.msra.mxu0 0.0
      %1988 = vmatprep.subr.mxu0 0.0
      %1989 = vmatpush1.msra.mxu0 0.0
      %1990 = vmatprep.subr.mxu0 0.0
      %1991 = vmatpush1.msra.mxu0 0.0
      %1992 = vmatprep.subr.mxu0 0.0
      %1993 = vmatpush1.msra.mxu0 0.0
      %1994 = vmatprep.subr.mxu0 0.0
      %1995 = vmatpush1.msra.mxu0 0.0
      %1996 = vmatprep.subr.mxu0 0.0
      %1997 = vmatpush1.msra.mxu0 0.0
      %1998 = vmatprep.subr.mxu0 0.0
      %1999 = vmatpush1.msra.mxu0 0.0
      %2000 = vmatprep.subr.mxu0 0.0
      %2001 = vmatpush1.msra.mxu0 0.0
      %2002 = vmatprep.subr.mxu0 0.0
      %2003 = vmatpush1.msra.mxu0 0.0
      %2004 = vmatprep.subr.mxu0 0.0
      %2005 = vmatpush1.msra.mxu0 0.0
      %2006 = vmatprep.subr.mxu0 0.0
      %2007 = vmatpush1.msra.mxu0 0.0
      %v2008 = vand.u32 %v1365, 4294901760
      %v2009 = vsub.f32 %v1365, %v2008
      %v2010 = vand.u32 %v2009, 4294901760
      %v2011 = vsub.f32 %v2009, %v2010
      %v2012 = vand.u32 %v2011, 4294901760
      %2013 = vmatprep.subr.mxu0 %v2012
      %v2014 = vand.u32 %v1364, 4294901760
      %v2015 = vsub.f32 %v1364, %v2014
      %v2016 = vand.u32 %v2015, 4294901760
      %v2017 = vsub.f32 %v2015, %v2016
      %v2018 = vand.u32 %v2017, 4294901760
      %2019 = vmatpush1.msra.mxu0 %v2018
      %2020 = vmatprep.subr.mxu0 0.0
      %2021 = vmatpush2.msra.mxu0 0.0
      %2022 = vmatprep.subr.mxu0 0.0
      %2023 = vmatpush2.msra.mxu0 0.0
      %2024 = vmatprep.subr.mxu0 0.0
      %2025 = vmatpush2.msra.mxu0 0.0
      %2026 = vmatprep.subr.mxu0 0.0
      %2027 = vmatpush2.msra.mxu0 0.0
      %2028 = vmatprep.subr.mxu0 0.0
      %2029 = vmatpush2.msra.mxu0 0.0
      %2030 = vmatprep.subr.mxu0 0.0
      %2031 = vmatpush2.msra.mxu0 0.0
      %2032 = vmatprep.subr.mxu0 0.0
      %2033 = vmatpush2.msra.mxu0 0.0
      %2034 = vmatprep.subr.mxu0 0.0
      %2035 = vmatpush2.msra.mxu0 0.0
      %2036 = vmatprep.subr.mxu0 0.0
      %2037 = vmatpush2.msra.mxu0 0.0
      %2038 = vmatprep.subr.mxu0 0.0
      %2039 = vmatpush2.msra.mxu0 0.0
      %2040 = vmatprep.subr.mxu0 0.0
      %2041 = vmatpush2.msra.mxu0 0.0
      %2042 = vmatprep.subr.mxu0 0.0
      %2043 = vmatpush2.msra.mxu0 0.0
      %2044 = vmatprep.subr.mxu0 0.0
      %2045 = vmatpush2.msra.mxu0 0.0
      %2046 = vmatprep.subr.mxu0 0.0
      %2047 = vmatpush2.msra.mxu0 0.0
      %2048 = vmatprep.subr.mxu0 0.0
      %2049 = vmatpush2.msra.mxu0 0.0
      %2050 = vmatprep.subr.mxu0 0.0
      %2051 = vmatpush2.msra.mxu0 0.0
      %2052 = vmatprep.mubr.f32.mxu0 0.0
      %v2053 = vand.u32 %v1370, 4294901760
      %2054 = vmatmul.mubr.f32.gmra.mxu0 %v2053
      %v2055 = vpop.f32.mrf.mxu0
      %v2056 = vadd.f32 %v1963, %v2055
      %v2057 = vpop.f32.mrf.mxu0
      %v2058 = vadd.f32 %v1965, %v2057
      %2059 = vmatprep.mubr.f32.mxu0 0.0
      %v2060 = vand.u32 %v1373, 4294901760
      %2061 = vmatmul.mubr.f32.gmra.mxu0 %v2060
      %v2062 = vpop.f32.mrf.mxu0
      %v2063 = vadd.f32 %v1974, %v2062
      %v2064 = vpop.f32.mrf.mxu0
      %v2065 = vadd.f32 %v1976, %v2064
      %2066 = vdwg.mxu0
      %2067 = vmatprep.subr.mxu0 0.0
      %2068 = vmatpush1.msra.mxu0 0.0
      %2069 = vmatprep.subr.mxu0 0.0
      %2070 = vmatpush1.msra.mxu0 0.0
      %2071 = vmatprep.subr.mxu0 0.0
      %2072 = vmatpush1.msra.mxu0 0.0
      %2073 = vmatprep.subr.mxu0 0.0
      %2074 = vmatpush1.msra.mxu0 0.0
      %2075 = vmatprep.subr.mxu0 0.0
      %2076 = vmatpush1.msra.mxu0 0.0
      %2077 = vmatprep.subr.mxu0 0.0
      %2078 = vmatpush1.msra.mxu0 0.0
      %2079 = vmatprep.subr.mxu0 0.0
      %2080 = vmatpush1.msra.mxu0 0.0
      %2081 = vmatprep.subr.mxu0 0.0
      %2082 = vmatpush1.msra.mxu0 0.0
      %2083 = vmatprep.subr.mxu0 0.0
      %2084 = vmatpush1.msra.mxu0 0.0
      %2085 = vmatprep.subr.mxu0 0.0
      %2086 = vmatpush1.msra.mxu0 0.0
      %2087 = vmatprep.subr.mxu0 0.0
      %2088 = vmatpush1.msra.mxu0 0.0
      %2089 = vmatprep.subr.mxu0 0.0
      %2090 = vmatpush1.msra.mxu0 0.0
      %2091 = vmatprep.subr.mxu0 0.0
      %2092 = vmatpush1.msra.mxu0 0.0
      %2093 = vmatprep.subr.mxu0 0.0
      %2094 = vmatpush1.msra.mxu0 0.0
      %2095 = vmatprep.subr.mxu0 0.0
      %2096 = vmatpush1.msra.mxu0 0.0
      %v2097 = vand.u32 %v1365, 4294901760
      %v2098 = vsub.f32 %v1365, %v2097
      %2099 = vmatprep.subr.mxu0 %v2098
      %v2100 = vand.u32 %v1364, 4294901760
      %v2101 = vsub.f32 %v1364, %v2100
      %2102 = vmatpush1.msra.mxu0 %v2101
      %2103 = vmatprep.subr.mxu0 0.0
      %2104 = vmatpush2.msra.mxu0 0.0
      %2105 = vmatprep.subr.mxu0 0.0
      %2106 = vmatpush2.msra.mxu0 0.0
      %2107 = vmatprep.subr.mxu0 0.0
      %2108 = vmatpush2.msra.mxu0 0.0
      %2109 = vmatprep.subr.mxu0 0.0
      %2110 = vmatpush2.msra.mxu0 0.0
      %2111 = vmatprep.subr.mxu0 0.0
      %2112 = vmatpush2.msra.mxu0 0.0
      %2113 = vmatprep.subr.mxu0 0.0
      %2114 = vmatpush2.msra.mxu0 0.0
      %2115 = vmatprep.subr.mxu0 0.0
      %2116 = vmatpush2.msra.mxu0 0.0
      %2117 = vmatprep.subr.mxu0 0.0
      %2118 = vmatpush2.msra.mxu0 0.0
      %2119 = vmatprep.subr.mxu0 0.0
      %2120 = vmatpush2.msra.mxu0 0.0
      %2121 = vmatprep.subr.mxu0 0.0
      %2122 = vmatpush2.msra.mxu0 0.0
      %2123 = vmatprep.subr.mxu0 0.0
      %2124 = vmatpush2.msra.mxu0 0.0
      %2125 = vmatprep.subr.mxu0 0.0
      %2126 = vmatpush2.msra.mxu0 0.0
      %2127 = vmatprep.subr.mxu0 0.0
      %2128 = vmatpush2.msra.mxu0 0.0
      %2129 = vmatprep.subr.mxu0 0.0
      %2130 = vmatpush2.msra.mxu0 0.0
      %2131 = vmatprep.subr.mxu0 0.0
      %2132 = vmatpush2.msra.mxu0 0.0
      %2133 = vmatprep.subr.mxu0 0.0
      %2134 = vmatpush2.msra.mxu0 0.0
      %2135 = vmatprep.mubr.f32.mxu0 0.0
      %v2136 = vand.u32 %v1370, 4294901760
      %v2137 = vsub.f32 %v1370, %v2136
      %2138 = vmatmul.mubr.f32.gmra.mxu0 %v2137
      %v2139 = vpop.f32.mrf.mxu0
      %v2140 = vadd.f32 %v2056, %v2139
      %v2141 = vpop.f32.mrf.mxu0
      %v2142 = vadd.f32 %v2058, %v2141
      %2143 = vmatprep.mubr.f32.mxu0 0.0
      %v2144 = vand.u32 %v1373, 4294901760
      %v2145 = vsub.f32 %v1373, %v2144
      %2146 = vmatmul.mubr.f32.gmra.mxu0 %v2145
      %v2147 = vpop.f32.mrf.mxu0
      %v2148 = vadd.f32 %v2063, %v2147
      %v2149 = vpop.f32.mrf.mxu0
      %v2150 = vadd.f32 %v2065, %v2149
      %2151 = vdwg.mxu0
      %2152 = vmatprep.subr.mxu0 0.0
      %2153 = vmatpush1.msra.mxu0 0.0
      %2154 = vmatprep.subr.mxu0 0.0
      %2155 = vmatpush1.msra.mxu0 0.0
      %2156 = vmatprep.subr.mxu0 0.0
      %2157 = vmatpush1.msra.mxu0 0.0
      %2158 = vmatprep.subr.mxu0 0.0
      %2159 = vmatpush1.msra.mxu0 0.0
      %2160 = vmatprep.subr.mxu0 0.0
      %2161 = vmatpush1.msra.mxu0 0.0
      %2162 = vmatprep.subr.mxu0 0.0
      %2163 = vmatpush1.msra.mxu0 0.0
      %2164 = vmatprep.subr.mxu0 0.0
      %2165 = vmatpush1.msra.mxu0 0.0
      %2166 = vmatprep.subr.mxu0 0.0
      %2167 = vmatpush1.msra.mxu0 0.0
      %2168 = vmatprep.subr.mxu0 0.0
      %2169 = vmatpush1.msra.mxu0 0.0
      %2170 = vmatprep.subr.mxu0 0.0
      %2171 = vmatpush1.msra.mxu0 0.0
      %2172 = vmatprep.subr.mxu0 0.0
      %2173 = vmatpush1.msra.mxu0 0.0
      %2174 = vmatprep.subr.mxu0 0.0
      %2175 = vmatpush1.msra.mxu0 0.0
      %2176 = vmatprep.subr.mxu0 0.0
      %2177 = vmatpush1.msra.mxu0 0.0
      %2178 = vmatprep.subr.mxu0 0.0
      %2179 = vmatpush1.msra.mxu0 0.0
      %2180 = vmatprep.subr.mxu0 0.0
      %2181 = vmatpush1.msra.mxu0 0.0
      %v2182 = vand.u32 %v1365, 4294901760
      %2183 = vmatprep.subr.mxu0 %v2182
      %v2184 = vand.u32 %v1364, 4294901760
      %2185 = vmatpush1.msra.mxu0 %v2184
      %2186 = vmatprep.subr.mxu0 0.0
      %2187 = vmatpush2.msra.mxu0 0.0
      %2188 = vmatprep.subr.mxu0 0.0
      %2189 = vmatpush2.msra.mxu0 0.0
      %2190 = vmatprep.subr.mxu0 0.0
      %2191 = vmatpush2.msra.mxu0 0.0
      %2192 = vmatprep.subr.mxu0 0.0
      %2193 = vmatpush2.msra.mxu0 0.0
      %2194 = vmatprep.subr.mxu0 0.0
      %2195 = vmatpush2.msra.mxu0 0.0
      %2196 = vmatprep.subr.mxu0 0.0
      %2197 = vmatpush2.msra.mxu0 0.0
      %2198 = vmatprep.subr.mxu0 0.0
      %2199 = vmatpush2.msra.mxu0 0.0
      %2200 = vmatprep.subr.mxu0 0.0
      %2201 = vmatpush2.msra.mxu0 0.0
      %2202 = vmatprep.subr.mxu0 0.0
      %2203 = vmatpush2.msra.mxu0 0.0
      %2204 = vmatprep.subr.mxu0 0.0
      %2205 = vmatpush2.msra.mxu0 0.0
      %2206 = vmatprep.subr.mxu0 0.0
      %2207 = vmatpush2.msra.mxu0 0.0
      %2208 = vmatprep.subr.mxu0 0.0
      %2209 = vmatpush2.msra.mxu0 0.0
      %2210 = vmatprep.subr.mxu0 0.0
      %2211 = vmatpush2.msra.mxu0 0.0
      %2212 = vmatprep.subr.mxu0 0.0
      %2213 = vmatpush2.msra.mxu0 0.0
      %2214 = vmatprep.subr.mxu0 0.0
      %2215 = vmatpush2.msra.mxu0 0.0
      %2216 = vmatprep.subr.mxu0 0.0
      %2217 = vmatpush2.msra.mxu0 0.0
      %2218 = vmatprep.mubr.f32.mxu0 0.0
      %v2219 = vand.u32 %v1370, 4294901760
      %v2220 = vsub.f32 %v1370, %v2219
      %v2221 = vand.u32 %v2220, 4294901760
      %2222 = vmatmul.mubr.f32.gmra.mxu0 %v2221
      %v2223 = vpop.f32.mrf.mxu0
      %v2224 = vadd.f32 %v2140, %v2223
      %v2225 = vpop.f32.mrf.mxu0
      %v2226 = vadd.f32 %v2142, %v2225
      %2227 = vmatprep.mubr.f32.mxu0 0.0
      %v2228 = vand.u32 %v1373, 4294901760
      %v2229 = vsub.f32 %v1373, %v2228
      %v2230 = vand.u32 %v2229, 4294901760
      %2231 = vmatmul.mubr.f32.gmra.mxu0 %v2230
      %v2232 = vpop.f32.mrf.mxu0
      %v2233 = vadd.f32 %v2148, %v2232
      %v2234 = vpop.f32.mrf.mxu0
      %v2235 = vadd.f32 %v2150, %v2234
      %2236 = vdwg.mxu0
      %2237 = vmatprep.subr.mxu0 0.0
      %2238 = vmatpush1.msra.mxu0 0.0
      %2239 = vmatprep.subr.mxu0 0.0
      %2240 = vmatpush1.msra.mxu0 0.0
      %2241 = vmatprep.subr.mxu0 0.0
      %2242 = vmatpush1.msra.mxu0 0.0
      %2243 = vmatprep.subr.mxu0 0.0
      %2244 = vmatpush1.msra.mxu0 0.0
      %2245 = vmatprep.subr.mxu0 0.0
      %2246 = vmatpush1.msra.mxu0 0.0
      %2247 = vmatprep.subr.mxu0 0.0
      %2248 = vmatpush1.msra.mxu0 0.0
      %2249 = vmatprep.subr.mxu0 0.0
      %2250 = vmatpush1.msra.mxu0 0.0
      %2251 = vmatprep.subr.mxu0 0.0
      %2252 = vmatpush1.msra.mxu0 0.0
      %2253 = vmatprep.subr.mxu0 0.0
      %2254 = vmatpush1.msra.mxu0 0.0
      %2255 = vmatprep.subr.mxu0 0.0
      %2256 = vmatpush1.msra.mxu0 0.0
      %2257 = vmatprep.subr.mxu0 0.0
      %2258 = vmatpush1.msra.mxu0 0.0
      %2259 = vmatprep.subr.mxu0 0.0
      %2260 = vmatpush1.msra.mxu0 0.0
      %2261 = vmatprep.subr.mxu0 0.0
      %2262 = vmatpush1.msra.mxu0 0.0
      %2263 = vmatprep.subr.mxu0 0.0
      %2264 = vmatpush1.msra.mxu0 0.0
      %2265 = vmatprep.subr.mxu0 0.0
      %2266 = vmatpush1.msra.mxu0 0.0
      %v2267 = vand.u32 %v1365, 4294901760
      %v2268 = vsub.f32 %v1365, %v2267
      %v2269 = vand.u32 %v2268, 4294901760
      %2270 = vmatprep.subr.mxu0 %v2269
      %v2271 = vand.u32 %v1364, 4294901760
      %v2272 = vsub.f32 %v1364, %v2271
      %v2273 = vand.u32 %v2272, 4294901760
      %2274 = vmatpush1.msra.mxu0 %v2273
      %2275 = vmatprep.subr.mxu0 0.0
      %2276 = vmatpush2.msra.mxu0 0.0
      %2277 = vmatprep.subr.mxu0 0.0
      %2278 = vmatpush2.msra.mxu0 0.0
      %2279 = vmatprep.subr.mxu0 0.0
      %2280 = vmatpush2.msra.mxu0 0.0
      %2281 = vmatprep.subr.mxu0 0.0
      %2282 = vmatpush2.msra.mxu0 0.0
      %2283 = vmatprep.subr.mxu0 0.0
      %2284 = vmatpush2.msra.mxu0 0.0
      %2285 = vmatprep.subr.mxu0 0.0
      %2286 = vmatpush2.msra.mxu0 0.0
      %2287 = vmatprep.subr.mxu0 0.0
      %2288 = vmatpush2.msra.mxu0 0.0
      %2289 = vmatprep.subr.mxu0 0.0
      %2290 = vmatpush2.msra.mxu0 0.0
      %2291 = vmatprep.subr.mxu0 0.0
      %2292 = vmatpush2.msra.mxu0 0.0
      %2293 = vmatprep.subr.mxu0 0.0
      %2294 = vmatpush2.msra.mxu0 0.0
      %2295 = vmatprep.subr.mxu0 0.0
      %2296 = vmatpush2.msra.mxu0 0.0
      %2297 = vmatprep.subr.mxu0 0.0
      %2298 = vmatpush2.msra.mxu0 0.0
      %2299 = vmatprep.subr.mxu0 0.0
      %2300 = vmatpush2.msra.mxu0 0.0
      %2301 = vmatprep.subr.mxu0 0.0
      %2302 = vmatpush2.msra.mxu0 0.0
      %2303 = vmatprep.subr.mxu0 0.0
      %2304 = vmatpush2.msra.mxu0 0.0
      %2305 = vmatprep.subr.mxu0 0.0
      %2306 = vmatpush2.msra.mxu0 0.0
      %2307 = vmatprep.mubr.f32.mxu0 0.0
      %v2308 = vand.u32 %v1370, 4294901760
      %2309 = vmatmul.mubr.f32.gmra.mxu0 %v2308
      %v2310 = vpop.f32.mrf.mxu0
      %v2311 = vadd.f32 %v2224, %v2310
      %v2312 = vpop.f32.mrf.mxu0
      %v2313 = vadd.f32 %v2226, %v2312
      %2314 = vmatprep.mubr.f32.mxu0 0.0
      %v2315 = vand.u32 %v1373, 4294901760
      %2316 = vmatmul.mubr.f32.gmra.mxu0 %v2315
      %v2317 = vpop.f32.mrf.mxu0
      %v2318 = vadd.f32 %v2233, %v2317
      %v2319 = vpop.f32.mrf.mxu0
      %v2320 = vadd.f32 %v2235, %v2319
      %2321 = vdwg.mxu0
      %2322 = vmatprep.subr.mxu0 0.0
      %2323 = vmatpush1.msra.mxu0 0.0
      %2324 = vmatprep.subr.mxu0 0.0
      %2325 = vmatpush1.msra.mxu0 0.0
      %2326 = vmatprep.subr.mxu0 0.0
      %2327 = vmatpush1.msra.mxu0 0.0
      %2328 = vmatprep.subr.mxu0 0.0
      %2329 = vmatpush1.msra.mxu0 0.0
      %2330 = vmatprep.subr.mxu0 0.0
      %2331 = vmatpush1.msra.mxu0 0.0
      %2332 = vmatprep.subr.mxu0 0.0
      %2333 = vmatpush1.msra.mxu0 0.0
      %2334 = vmatprep.subr.mxu0 0.0
      %2335 = vmatpush1.msra.mxu0 0.0
      %2336 = vmatprep.subr.mxu0 0.0
      %2337 = vmatpush1.msra.mxu0 0.0
      %2338 = vmatprep.subr.mxu0 0.0
      %2339 = vmatpush1.msra.mxu0 0.0
      %2340 = vmatprep.subr.mxu0 0.0
      %2341 = vmatpush1.msra.mxu0 0.0
      %2342 = vmatprep.subr.mxu0 0.0
      %2343 = vmatpush1.msra.mxu0 0.0
      %2344 = vmatprep.subr.mxu0 0.0
      %2345 = vmatpush1.msra.mxu0 0.0
      %2346 = vmatprep.subr.mxu0 0.0
      %2347 = vmatpush1.msra.mxu0 0.0
      %2348 = vmatprep.subr.mxu0 0.0
      %2349 = vmatpush1.msra.mxu0 0.0
      %2350 = vmatprep.subr.mxu0 0.0
      %2351 = vmatpush1.msra.mxu0 0.0
      %v2352 = vand.u32 %v1365, 4294901760
      %2353 = vmatprep.subr.mxu0 %v2352
      %v2354 = vand.u32 %v1364, 4294901760
      %2355 = vmatpush1.msra.mxu0 %v2354
      %2356 = vmatprep.subr.mxu0 0.0
      %2357 = vmatpush2.msra.mxu0 0.0
      %2358 = vmatprep.subr.mxu0 0.0
      %2359 = vmatpush2.msra.mxu0 0.0
      %2360 = vmatprep.subr.mxu0 0.0
      %2361 = vmatpush2.msra.mxu0 0.0
      %2362 = vmatprep.subr.mxu0 0.0
      %2363 = vmatpush2.msra.mxu0 0.0
      %2364 = vmatprep.subr.mxu0 0.0
      %2365 = vmatpush2.msra.mxu0 0.0
      %2366 = vmatprep.subr.mxu0 0.0
      %2367 = vmatpush2.msra.mxu0 0.0
      %2368 = vmatprep.subr.mxu0 0.0
      %2369 = vmatpush2.msra.mxu0 0.0
      %2370 = vmatprep.subr.mxu0 0.0
      %2371 = vmatpush2.msra.mxu0 0.0
      %2372 = vmatprep.subr.mxu0 0.0
      %2373 = vmatpush2.msra.mxu0 0.0
      %2374 = vmatprep.subr.mxu0 0.0
      %2375 = vmatpush2.msra.mxu0 0.0
      %2376 = vmatprep.subr.mxu0 0.0
      %2377 = vmatpush2.msra.mxu0 0.0
      %2378 = vmatprep.subr.mxu0 0.0
      %2379 = vmatpush2.msra.mxu0 0.0
      %2380 = vmatprep.subr.mxu0 0.0
      %2381 = vmatpush2.msra.mxu0 0.0
      %2382 = vmatprep.subr.mxu0 0.0
      %2383 = vmatpush2.msra.mxu0 0.0
      %2384 = vmatprep.subr.mxu0 0.0
      %2385 = vmatpush2.msra.mxu0 0.0
      %2386 = vmatprep.subr.mxu0 0.0
      %2387 = vmatpush2.msra.mxu0 0.0
      %2388 = vmatprep.mubr.f32.mxu0 0.0
      %v2389 = vand.u32 %v1370, 4294901760
      %2390 = vmatmul.mubr.f32.gmra.mxu0 %v2389
      %v2391 = vpop.f32.mrf.mxu0
      %v2392 = vadd.f32 %v2311, %v2391
      %v2393 = vpop.f32.mrf.mxu0
      %v2394 = vadd.f32 %v2313, %v2393
      %2395 = vmatprep.mubr.f32.mxu0 0.0
      %v2396 = vand.u32 %v1373, 4294901760
      %2397 = vmatmul.mubr.f32.gmra.mxu0 %v2396
      %v2398 = vpop.f32.mrf.mxu0
      %v2399 = vadd.f32 %v2318, %v2398
      %v2400 = vpop.f32.mrf.mxu0
      %v2401 = vadd.f32 %v2320, %v2400
      %2402 = vdwg.mxu0
      %v2403 = vmax.f32 %v264, 0.0
      %v2404 = vmax.f32 %v265, 0.0
      %v2405 = vmax.f32 %v266, 0.0
      %v2406 = vmax.f32 %v267, 0.0
      %v2407 = vmax.f32 %v268, 0.0
      %v2408 = vmax.f32 %v269, 0.0
      %v2409 = vmax.f32 %v270, 0.0
      %v2410 = vmax.f32 %v271, 0.0
      %v2411 = vld [vmem:[%s3] sm:$0xff]
      %v2412 = vld [vmem:[%s3 + $0x8] sm:$0x1f]
      %vm2413 = vcmp.ne.f32.partialorder %v2411, 0.0
      %vm2414 = vcmp.ne.f32.partialorder %v2412, 0.0
      %v2415 = vmul.f32 %v1878, %v264
      %v2416 = vmul.f32 %v1880, %v265
      %v2417 = vmul.f32 %v2392, %v266
      %v2418 = vmul.f32 %v2394, %v267
      %v2419 = vmul.f32 %v1885, %v268
      %v2420 = vmul.f32 %v1887, %v269
      %v2421 = vmul.f32 %v2399, %v270
      %v2422 = vmul.f32 %v2401, %v271
      %v2423 = vsel %vm2413, 1, 0
      %v2424 = vsel %vm2414, 1, 0
      %2425 = vset.pattern.permute.xlu0 0
      %2426 = vperm.xlu0 %2425, %v2423
      %v2427 = vpop.permute.xlu0 %2426
      %2428 = vset.pattern.permute.xlu0 0
      %2429 = vperm.xlu0 %2428, %v2424
      %v2430 = vpop.permute.xlu0 %2429
      %vm2431 = vcmp.eq.s32.totalorder %v2427, 1
      %vm2432 = vcmp.eq.s32.totalorder %v2430, 1
      %v2433 = vsel %vm2431, %v2403, %v2415
      %v2434 = vsel %vm2431, %v2404, %v2416
      %v2435 = vsel %vm2431, %v2405, %v2417
      %v2436 = vsel %vm2431, %v2406, %v2418
      %v2437 = vsel %vm2432, %v2407, %v2419
      %v2438 = vsel %vm2432, %v2408, %v2420
      %v2439 = vsel %vm2432, %v2409, %v2421
      %v2440 = vsel %vm2432, %v2410, %v2422
      %2441 = vst [vmem:[%s262] sm:$0xff] %v2433
      %2442 = vst [vmem:[%s262 + $0x8] sm:$0xff] %v2434
      %2443 = vst [vmem:[%s262 + $0x10] sm:$0xff] %v2435
      %2444 = vst [vmem:[%s262 + $0x18] sm:$0xff] %v2436
      %2445 = vst [vmem:[%s262 + $0x20] sm:$0x1f] %v2437
      %2446 = vst [vmem:[%s262 + $0x28] sm:$0x1f] %v2438
      %2447 = vst [vmem:[%s262 + $0x30] sm:$0x1f] %v2439
      %2448 = vst [vmem:[%s262 + $0x38] sm:$0x1f] %v2440
      %s2449 = smul.u32 4, %s21
      %p2450 = scmp.lt.s32.totalorder %s20, 1
      %s2451 = scalar_select %p2450, %s20, 1
      %p2452 = scmp.lt.s32.totalorder %s2449, 3
      %s2453 = scalar_select %p2452, %s2449, 3
      %s2454 = smul.addr %s2451, 8
      %s2455 = sadd.s32 %s2453, %s2454
      %s2456 = smul.addr %s2455, 8
      %s2457 = scalar_lea.vmem %s5, %s2456
      // Predicated region
      $region41: #{tpu_custom_call.1} parent=39 // pred_check
        %p2458 = pneg %p160
      $region42: #{tpu_custom_call.1} parent=39 // pred_check_branch
        %2460 = sbr.rel (%p2458) target = $region44
      $region43: #{tpu_custom_call.1} parent=39 // pred_region
        %s2461 = smul.u32 4, %s21
      $region44: #{tpu_custom_call.1} parent=39 // pred_fallthru
        _
    $region40: #{tpu_custom_call.1} parent=5 // pred_fallthru
      _
    %p2462 = scmp.le.s32.totalorder 2, %s11
    // Predicated region
    $region45: #{tpu_custom_call.1} parent=5 // pred_check
      %p2463 = pneg %p2462
    $region46: #{tpu_custom_call.1} parent=5 // pred_check_branch
      %2465 = sbr.rel (%p2463) target = $region48
    $region47: #{tpu_custom_call.1} parent=5 // pred_region
      %s2466 = ssub.s32 %s11, 2
      // Predicated region
      $region49: #{tpu_custom_call.1} parent=47 // pred_check
        %p2467 = pneg %p166
      $region50: #{tpu_custom_call.1} parent=47 // pred_check_branch
        %2469 = sbr.rel (%p2467) target = $region52
      $region51: #{tpu_custom_call.1} parent=47 // pred_region
        %s2470 = smul.u32 4, %s23
        %p2471 = scmp.lt.s32.totalorder %s22, 1
        %s2472 = scalar_select %p2471, %s22, 1
        %p2473 = scmp.lt.s32.totalorder %s2470, 3
        %s2474 = scalar_select %p2473, %s2470, 3
        %s2475 = smul.addr %s2472, 8
        %s2476 = sadd.s32 %s2474, %s2475
        %s2477 = smul.addr %s2476, 8
        %s2478 = scalar_lea.vmem %s5, %s2477
      $region52: #{tpu_custom_call.1} parent=47 // pred_fallthru
        _
    $region48: #{tpu_custom_call.1} parent=5 // pred_fallthru
      _
  $region6: #{tpu_custom_call.1} parent=0 // loop_footer
    %s15 = sadd.s32 1, %s11
  $region7: #{tpu_custom_call.1} parent=0 // loop_footer_branch
    %10 = sbr.rel target = $region3
  $region8: #{tpu_custom_call.1} parent=0 // loop_exit
    _

</llo_original>
